<compile_context>
chip_gen: v7x
topology: tpu7x:2x2x1
jax: 0.10.0
libtpu: 0.0.40
codegen_flags: <defaults>
</compile_context>

<pallas_src>
from functools import partial

import jax
import jax.numpy as jnp
import numpy as np
from jax.experimental import pallas as pl
from jax.experimental.pallas import tpu as pltpu


# --------------------------------------------------------------------------
# Fused Pallas kernel (B_blk batch elements per grid step, rows = B_blk * N)
# --------------------------------------------------------------------------

def _st_block_kernel(x_ref, ytb_ref, e1_ref, e2_ref, w1_ref, b1_ref,
                     ws_ref, w2_ref, b2_ref, o_ref, xc_scr, *, Cin, C1, nh1, nh2):
    """Whole st_conv_block for B_blk batch elements, node-major lane-packed.

    x_ref : [rows, T*Cin]        bf16, row = b_local*N + node, lane = frame*Cin + ch
    ytb_ref: [rows, rows]        bf16, kron(I_B_blk, Y^T)
    e1_ref: [rows, Cin]          f32, frame-0 embedding (stage 1), tiled over B_blk
    e2_ref: [rows, C1]           f32, frame-0 embedding (stage 2), tiled over B_blk
    w1_ref: [T*Cin,  2*nh1]      bf16 banded weights for BOTH stage-1 GLU segments
    b1_ref: [1, 2*nh1]           f32
    ws_ref: [Tc*C1, Tc*C1]       bf16 kron(I_Tc, W_spatial), rows permuted to xc layout
    w2_ref: [Tc*C1, 2*nh2]       bf16 banded weights for BOTH stage-2 GLU segments
    b2_ref: [1, 2*nh2]           f32
    o_ref : [rows, Tout_f*C2]    f32, lanes = [GLU frames 1..Tout_f-1 | frame 0]
    xc_scr: [rows, Tc*C1]        bf16 VMEM scratch (spatial-conv input)
    """
    f32 = jnp.float32
    bf16 = jnp.bfloat16
    x = x_ref[...]                                                    # [rows, T*Cin] bf16

    # ---- stage 1: both temporal GLU segments folded into ONE banded matmul ----
    s1 = jnp.dot(x, w1_ref[...], preferred_element_type=f32) + b1_ref[...]
    h1 = s1[:, :nh1] * jax.nn.sigmoid(s1[:, nh1:])                    # f32, frames 1..Tc-1

    x0 = e1_ref[...] * x[:, :Cin].astype(f32)                         # frame-0 embedding

    # slot-write (no concat): GLU block at lane 0 (aligned), frame-0 block last.
    xc_scr[:, :nh1] = h1.astype(bf16)
    xc_scr[:, nh1:] = x0.astype(bf16)

    # ---- spatial graph conv: relu( blockdiag(Y^T) @ (Xc @ kron(I, Ws)) ) ------
    z = jnp.dot(xc_scr[...], ws_ref[...], preferred_element_type=f32)  # [rows, Tc*C1]
    a = jnp.maximum(
        jnp.dot(ytb_ref[...], z.astype(bf16), preferred_element_type=f32), 0.0)

    # ---- stage 2: both temporal GLU segments folded into ONE banded matmul ----
    s2 = jnp.dot(a.astype(bf16), w2_ref[...], preferred_element_type=f32) + b2_ref[...]
    g1 = s2[:, :nh2] * jax.nn.sigmoid(s2[:, nh2:])                     # frames 1..Tout_f-1
    g0 = e2_ref[...] * a[:, :C1]                                       # frame-0 embedding

    # slot-write the output (frame order un-permuted in the wrapper)
    o_ref[:, :nh2] = g1.astype(o_ref.dtype)
    o_ref[:, nh2:] = g0.astype(o_ref.dtype)


# --------------------------------------------------------------------------
# One-time weight packing (run OUTSIDE the per-call jit)
# --------------------------------------------------------------------------

def _banded_weights(w, b, f_start, seg_len, t_in):
    """Banded 'conv-as-matmul' weights for one temporal GLU segment.

    w: [KT, Cin, 2*Cout], b: [1, 2*Cout].  Built with a constant numpy band mask
    and a single einsum (no chained dynamic-update-slices).
    Returns Wp, Wq: [t_in*Cin, Tout*Cout] and bp, bq: [1, Tout*Cout].
    """
    KT, Cin, Co2 = w.shape
    Cout = Co2 // 2
    Tout = seg_len - KT + 1
    band = np.zeros((KT, t_in, Tout), np.float32)
    for j in range(Tout):
        for k in range(KT):
            band[k, f_start + j + k, j] = 1.0
    band = jnp.asarray(band)
    Wp = jnp.einsum("kfj,kio->fijo", band, w[:, :, :Cout]).reshape(t_in * Cin, Tout * Cout)
    Wq = jnp.einsum("kfj,kio->fijo", band, w[:, :, Cout:]).reshape(t_in * Cin, Tout * Cout)
    bp = jnp.tile(b[:, :Cout], (1, Tout))
    bq = jnp.tile(b[:, Cout:], (1, Tout))
    return Wp, Wq, bp, bq


def pack_block_params(params, *, KT, frames, frames_0):
    """Fold conv weights into banded matrices (bf16) + kron spatial weights. Run once."""
    T = frames
    C1 = params["w1_1"].shape[2] // 2
    Tc = T - 2 * (KT - 1)
    bf16, f32 = jnp.bfloat16, jnp.float32

    # stage 1 (input frames 0..T-1): segment a = [1, frames_0), segment b = [frames_0, T)
    Wp1a, Wq1a, bp1a, bq1a = _banded_weights(params["w1_1"], params["b1_1"], 1, frames_0 - 1, T)
    Wp1b, Wq1b, bp1b, bq1b = _banded_weights(params["w1_2"], params["b1_2"], frames_0, T - frames_0, T)
    w1 = jnp.concatenate([Wp1a, Wp1b, Wq1a, Wq1b], axis=1).astype(bf16)
    b1 = jnp.concatenate([bp1a, bp1b, bq1a, bq1b], axis=1).astype(f32)

    # spatial: kron(I_Tc, Ws), rows permuted to the kernel's xc lane layout
    # (GLU frames 1..Tc-1 first, frame 0 last)
    ws = jnp.kron(jnp.eye(Tc, dtype=f32), params["w_spat"].astype(f32))
    perm = np.concatenate([np.arange(C1, Tc * C1), np.arange(C1)])
    ws = ws[perm].astype(bf16)

    # stage 2 (input frames 0..Tc-1)
    f2a, l2a = 1, frames_0 - KT
    f2b = frames_0 - (KT - 1)
    l2b = Tc - f2b
    Wp2a, Wq2a, bp2a, bq2a = _banded_weights(params["w2_1"], params["b2_1"], f2a, l2a, Tc)
    Wp2b, Wq2b, bp2b, bq2b = _banded_weights(params["w2_2"], params["b2_2"], f2b, l2b, Tc)
    w2 = jnp.concatenate([Wp2a, Wp2b, Wq2a, Wq2b], axis=1).astype(bf16)
    b2 = jnp.concatenate([bp2a, bp2b, bq2a, bq2b], axis=1).astype(f32)

    return {
        "w1": w1, "b1": b1, "ws": ws, "w2": w2, "b2": b2,
        "e1": params["embed_1"][0].astype(f32),   # [N, Cin]
        "e2": params["embed_2"][0].astype(f32),   # [N, C1]
    }


def _pick_b_blk(B, N, target_rows=128):
    """Largest divisor of B with B_blk*N <= target_rows; keep >=2 grid steps if possible."""
    cap = max(1, target_rows // max(N, 1))
    b_blk = 1
    for d in range(1, min(B, cap) + 1):
        if B % d == 0:
            b_blk = d
    if B // b_blk < 2 and B > 1:          # keep both v7x TensorCores busy
        for d in range(b_blk - 1, 0, -1):
            if B % d == 0 and B // d >= 2:
                b_blk = d
                break
    return b_blk


# --------------------------------------------------------------------------
# st_conv_block forward
# --------------------------------------------------------------------------

@partial(jax.jit, static_argnames=("KT",))
def st_conv_block_forward(infos, Y, packed, *, KT):
    """infos: [B, C_in, frames, N] (NCHW), Y: [N, N] -> [B, C2, frames-4*(KT-1), N]."""
    B, C_in, T, N = infos.shape
    C1 = packed["e2"].shape[1]
    Tc = T - 2 * (KT - 1)
    Tout_f = T - 4 * (KT - 1)
    nh1 = packed["w1"].shape[1] // 2
    nh2 = packed["w2"].shape[1] // 2
    C2 = nh2 // (Tout_f - 1)
    # The time-axis concatenations in the original module silently require this.
    assert C_in == C1 == C2, "st_conv_block needs in_channels == out_channels_1 == out_channels_2"

    B_blk = _pick_b_blk(B, N)
    n_steps = B // B_blk
    rows = B_blk * N
    bf16 = jnp.bfloat16

    # node-major lane-packed input [B*N, T*Cin]; bf16 operands for the MXU
    x_nm = jnp.transpose(infos, (0, 3, 2, 1)).reshape(B * N, T * C_in).astype(bf16)

    # block-diagonal Y^T so one MXU pass mixes nodes of all B_blk folded batches
    ytb = jnp.kron(jnp.eye(B_blk, dtype=jnp.float32), Y.T.astype(jnp.float32)).astype(bf16)

    # frame-0 embeddings tiled over the folded batch rows (f32, elementwise path)
    e1t = jnp.tile(packed["e1"], (B_blk, 1))
    e2t = jnp.tile(packed["e2"], (B_blk, 1))

    kernel = partial(_st_block_kernel, Cin=C_in, C1=C1, nh1=nh1, nh2=nh2)

    out2d = pl.pallas_call(
        kernel,
        out_shape=jax.ShapeDtypeStruct((B * N, Tout_f * C2), jnp.float32),
        grid=(n_steps,),
        in_specs=[
            pl.BlockSpec((rows, T * C_in), lambda b: (b, 0)),       # per-step input slab
            pl.BlockSpec((rows, rows), lambda b: (0, 0)),           # kron(I_Bblk, Y^T)
            pl.BlockSpec((rows, C_in), lambda b: (0, 0)),           # embed_1 (tiled)
            pl.BlockSpec((rows, C1), lambda b: (0, 0)),             # embed_2 (tiled)
            pl.BlockSpec((T * C_in, 2 * nh1), lambda b: (0, 0)),    # stage-1 banded W
            pl.BlockSpec((1, 2 * nh1), lambda b: (0, 0)),           # stage-1 bias
            pl.BlockSpec((Tc * C1, Tc * C1), lambda b: (0, 0)),     # kron(I_Tc, Ws), perm'd
            pl.BlockSpec((Tc * C1, 2 * nh2), lambda b: (0, 0)),     # stage-2 banded W
            pl.BlockSpec((1, 2 * nh2), lambda b: (0, 0)),           # stage-2 bias
        ],
        out_specs=pl.BlockSpec((rows, Tout_f * C2), lambda b: (b, 0)),
        scratch_shapes=[pltpu.VMEM((rows, Tc * C1), bf16)],
        compiler_params=pltpu.CompilerParams(dimension_semantics=("parallel",)),
    )(x_nm, ytb, e1t, e2t, packed["w1"], packed["b1"], packed["ws"],
      packed["w2"], packed["b2"])

    # kernel lane order was [frames 1..Tout_f-1 | frame 0]; restore order + NCHW
    out_f = out2d.reshape(B, N, Tout_f, C2)
    out_f = jnp.roll(out_f, 1, axis=2)
    return jnp.transpose(out_f, (0, 3, 2, 1))


# --------------------------------------------------------------------------
# Pure-JAX reference (same math, f32 HIGHEST precision) for validation
# --------------------------------------------------------------------------

def _ref_temporal_glu(x, w, b):
    KT, Cin, Co2 = w.shape
    Cout = Co2 // 2
    Tout = x.shape[1] - KT + 1
    s = jnp.zeros(x.shape[:1] + (Tout, x.shape[2], Co2), jnp.float32)
    for k in range(KT):
        s = s + jnp.einsum("btnc,co->btno",
                           x[:, k:k + Tout].astype(jnp.float32),
                           w[k].astype(jnp.float32),
                           precision=jax.lax.Precision.HIGHEST)
    s = s + b.reshape(1, 1, 1, Co2)
    return s[..., :Cout] * jax.nn.sigmoid(s[..., Cout:])


def _ref_spatial(Y, x, W):
    z = jnp.einsum("btnc,cd->btnd", x.astype(jnp.float32), W,
                   precision=jax.lax.Precision.HIGHEST)
    agg = jnp.einsum("nm,btnd->btmd", Y, z, precision=jax.lax.Precision.HIGHEST)
    return jnp.maximum(agg, 0.0)


def ref_forward(infos, Y, params, *, KT, frames_0):
    x = jnp.transpose(infos, (0, 2, 3, 1))
    x0 = (params["embed_1"] * x[:, 0])[:, None]
    x1 = _ref_temporal_glu(x[:, 1:frames_0], params["w1_1"], params["b1_1"])
    x2 = _ref_temporal_glu(x[:, frames_0:], params["w1_2"], params["b1_2"])
    x_conv = jnp.concatenate([x0, x1, x2], axis=1)
    x_upd = _ref_spatial(Y, x_conv, params["w_spat"])
    g0 = (params["embed_2"] * x_upd[:, 0])[:, None]
    g1 = _ref_temporal_glu(x_upd[:, 1:frames_0 - (KT - 1)], params["w2_1"], params["b2_1"])
    g2 = _ref_temporal_glu(x_upd[:, frames_0 - (KT - 1):], params["w2_2"], params["b2_2"])
    g_conv = jnp.concatenate([g0, g1, g2], axis=1)
    return jnp.transpose(g_conv, (0, 3, 1, 2))


# --------------------------------------------------------------------------
# Parameter init (deterministic, synthetic)
# --------------------------------------------------------------------------

def init_params(key, C_in, C1, C2, KT, N):
    ks = jax.random.split(key, 11)
    f32 = jnp.float32
    return {
        "embed_1": jax.random.normal(ks[0], (1, N, C_in), f32),
        "embed_2": jax.random.normal(ks[1], (1, N, C1), f32),
        "w1_1": jax.random.normal(ks[2], (KT, C_in, 2 * C1), f32) * 0.5,
        "b1_1": jax.random.normal(ks[3], (1, 2 * C1), f32) * 0.1,
        "w1_2": jax.random.normal(ks[4], (KT, C_in, 2 * C1), f32) * 0.5,
        "b1_2": jax.random.normal(ks[5], (1, 2 * C1), f32) * 0.1,
        "w_spat": jax.random.normal(ks[6], (C1, C1), f32) * 0.5,
        "w2_1": jax.random.normal(ks[7], (KT, C1, 2 * C2), f32) * 0.5,
        "b2_1": jax.random.normal(ks[8], (1, 2 * C2), f32) * 0.1,
        "w2_2": jax.random.normal(ks[9], (KT, C1, 2 * C2), f32) * 0.5,
        "b2_2": jax.random.normal(ks[10], (1, 2 * C2), f32) * 0.1,
    }


# --------------------------------------------------------------------------

if __name__ == "__main__":
    # in_channels == out_channels_1 == out_channels_2 is required by the module's
    # time-axis concatenations.  B=16 gives 2 parallel grid steps of 128 MXU rows.
    B, C_in, C1, C2 = 16, 4, 4, 4
    KT, N = 3, 16
    frames, frames_0 = 16, 8

    key = jax.random.PRNGKey(0)
    k_in, k_y, k_p = jax.random.split(key, 3)
    infos = jax.random.normal(k_in, (B, C_in, frames, N), jnp.float32)
    Y = jax.random.normal(k_y, (N, N), jnp.float32) * 0.3
    params = init_params(k_p, C_in, C1, C2, KT, N)

    # one-time weight packing (outside the per-step jit)
    packed = pack_block_params(params, KT=KT, frames=frames, frames_0=frames_0)
    packed = jax.tree_util.tree_map(jax.block_until_ready, packed)

    out = st_conv_block_forward(infos, Y, packed, KT=KT)
    out = jax.block_until_ready(out)

    assert out.shape == (B, C2, frames - 4 * (KT - 1), N), out.shape

    # bf16-operand / f32-accumulate MXU path vs a HIGHEST-precision f32 reference.
    ref = ref_forward(infos, Y, params, KT=KT, frames_0=frames_0)
    if not np.allclose(np.asarray(out), np.asarray(ref), rtol=5e-2, atol=7e-2):
        raise SystemExit(
            f"mismatch: max abs err {float(jnp.max(jnp.abs(out - ref)))}"
        )

    print("KERNEL_OK")
</pallas_src>

<mosaic_0001>
module attributes {stable_mosaic.version = 11 : i64} {
  func.func @_st_block_kernel(%arg0: i32, %arg1: memref<128x64xbf16, #tpu.memory_space<vmem>>, %arg2: memref<128x128xbf16, #tpu.memory_space<vmem>>, %arg3: memref<128x4xf32, #tpu.memory_space<vmem>>, %arg4: memref<128x4xf32, #tpu.memory_space<vmem>>, %arg5: memref<64x88xbf16, #tpu.memory_space<vmem>>, %arg6: memref<1x88xf32, #tpu.memory_space<vmem>>, %arg7: memref<48x48xbf16, #tpu.memory_space<vmem>>, %arg8: memref<48x56xbf16, #tpu.memory_space<vmem>>, %arg9: memref<1x56xf32, #tpu.memory_space<vmem>>, %arg10: memref<128x32xf32, #tpu.memory_space<vmem>>, %arg11: memref<128x48xbf16, #tpu.memory_space<vmem>>) attributes {dimension_semantics = [#tpu.dimension_semantics<parallel>], iteration_bounds = array<i64: 2>, scalar_prefetch = 0 : i64, scratch_operands = 1 : i64, tpu.core_type = #tpu.core_type<tc>, window_params = [{transform_indices = @transform_0, window_bounds = array<i64: 128, 64>}, {pipeline_mode = #tpu.pipeline_mode<synchronous>, transform_indices = @transform_1, window_bounds = array<i64: 128, 128>}, {pipeline_mode = #tpu.pipeline_mode<synchronous>, transform_indices = @transform_2, window_bounds = array<i64: 128, 4>}, {pipeline_mode = #tpu.pipeline_mode<synchronous>, transform_indices = @transform_3, window_bounds = array<i64: 128, 4>}, {pipeline_mode = #tpu.pipeline_mode<synchronous>, transform_indices = @transform_4, window_bounds = array<i64: 64, 88>}, {pipeline_mode = #tpu.pipeline_mode<synchronous>, transform_indices = @transform_5, window_bounds = array<i64: 1, 88>}, {pipeline_mode = #tpu.pipeline_mode<synchronous>, transform_indices = @transform_6, window_bounds = array<i64: 48, 48>}, {pipeline_mode = #tpu.pipeline_mode<synchronous>, transform_indices = @transform_7, window_bounds = array<i64: 48, 56>}, {pipeline_mode = #tpu.pipeline_mode<synchronous>, transform_indices = @transform_8, window_bounds = array<i64: 1, 56>}, {transform_indices = @transform_9, window_bounds = array<i64: 128, 32>}]} {
    %c0 = arith.constant 0 : index
    %c0_0 = arith.constant 0 : index
    %0 = vector.load %arg1[%c0, %c0_0] : memref<128x64xbf16, #tpu.memory_space<vmem>>, vector<128x64xbf16>
    %c0_1 = arith.constant 0 : index
    %c0_2 = arith.constant 0 : index
    %1 = vector.load %arg5[%c0_1, %c0_2] : memref<64x88xbf16, #tpu.memory_space<vmem>>, vector<64x88xbf16>
    %cst = arith.constant dense<0.000000e+00> : vector<128x88xf32>
    %2 = tpu.matmul %0, %1, %cst {dimension_numbers = #tpu.dot_dimension_numbers<[1], [0], [0], [1], [0, 0, 1, 1], [], []>} : vector<128x64xbf16>, vector<64x88xbf16>, vector<128x88xf32> -> vector<128x88xf32>
    %c0_3 = arith.constant 0 : index
    %c0_4 = arith.constant 0 : index
    %3 = vector.load %arg6[%c0_3, %c0_4] : memref<1x88xf32, #tpu.memory_space<vmem>>, vector<1x88xf32>
    %4 = vector.broadcast %3 : vector<1x88xf32> to vector<128x88xf32>
    %5 = arith.addf %2, %4 : vector<128x88xf32>
    %6 = vector.extract_strided_slice %5 {offsets = [0, 0], sizes = [128, 44], strides = [1, 1]} : vector<128x88xf32> to vector<128x44xf32>
    %7 = vector.extract_strided_slice %5 {offsets = [0, 44], sizes = [128, 44], strides = [1, 1]} : vector<128x88xf32> to vector<128x44xf32>
    %8 = arith.negf %7 : vector<128x44xf32>
    %9 = math.exp %8 : vector<128x44xf32>
    %cst_5 = arith.constant 1.000000e+00 : f32
    %10 = vector.broadcast %cst_5 : f32 to vector<128x44xf32>
    %11 = arith.addf %10, %9 : vector<128x44xf32>
    %12 = arith.divf %10, %11 : vector<128x44xf32>
    %13 = arith.mulf %6, %12 : vector<128x44xf32>
    %c0_6 = arith.constant 0 : index
    %c0_7 = arith.constant 0 : index
    %14 = vector.load %arg3[%c0_6, %c0_7] : memref<128x4xf32, #tpu.memory_space<vmem>>, vector<128x4xf32>
    %15 = vector.extract_strided_slice %0 {offsets = [0, 0], sizes = [128, 4], strides = [1, 1]} : vector<128x64xbf16> to vector<128x4xbf16>
    %16 = arith.extf %15 : vector<128x4xbf16> to vector<128x4xf32>
    %17 = arith.mulf %14, %16 : vector<128x4xf32>
    %18 = arith.truncf %13 : vector<128x44xf32> to vector<128x44xbf16>
    %c0_8 = arith.constant 0 : index
    %c0_9 = arith.constant 0 : index
    %19 = vector.load %arg11[%c0_8, %c0_9] : memref<128x48xbf16, #tpu.memory_space<vmem>>, vector<128x44xbf16>
    tpu.vector_store %arg11[%c0_8, %c0_9], %18 {strides = array<i32>} : memref<128x48xbf16, #tpu.memory_space<vmem>>, vector<128x44xbf16>,
    %20 = arith.truncf %17 : vector<128x4xf32> to vector<128x4xbf16>
    %c0_10 = arith.constant 0 : index
    %c44 = arith.constant 44 : index
    %21 = vector.load %arg11[%c0_10, %c44] : memref<128x48xbf16, #tpu.memory_space<vmem>>, vector<128x4xbf16>
    tpu.vector_store %arg11[%c0_10, %c44], %20 {strides = array<i32>} : memref<128x48xbf16, #tpu.memory_space<vmem>>, vector<128x4xbf16>,
    %c0_11 = arith.constant 0 : index
    %c0_12 = arith.constant 0 : index
    %22 = vector.load %arg11[%c0_11, %c0_12] : memref<128x48xbf16, #tpu.memory_space<vmem>>, vector<128x48xbf16>
    %c0_13 = arith.constant 0 : index
    %c0_14 = arith.constant 0 : index
    %23 = vector.load %arg7[%c0_13, %c0_14] : memref<48x48xbf16, #tpu.memory_space<vmem>>, vector<48x48xbf16>
    %cst_15 = arith.constant dense<0.000000e+00> : vector<128x48xf32>
    %24 = tpu.matmul %22, %23, %cst_15 {dimension_numbers = #tpu.dot_dimension_numbers<[1], [0], [0], [1], [0, 0, 1, 1], [], []>} : vector<128x48xbf16>, vector<48x48xbf16>, vector<128x48xf32> -> vector<128x48xf32>
    %c0_16 = arith.constant 0 : index
    %c0_17 = arith.constant 0 : index
    %25 = vector.load %arg2[%c0_16, %c0_17] : memref<128x128xbf16, #tpu.memory_space<vmem>>, vector<128x128xbf16>
    %26 = arith.truncf %24 : vector<128x48xf32> to vector<128x48xbf16>
    %cst_18 = arith.constant dense<0.000000e+00> : vector<128x48xf32>
    %27 = tpu.matmul %25, %26, %cst_18 {dimension_numbers = #tpu.dot_dimension_numbers<[1], [0], [0], [1], [0, 0, 1, 1], [], []>} : vector<128x128xbf16>, vector<128x48xbf16>, vector<128x48xf32> -> vector<128x48xf32>
    %cst_19 = arith.constant 0.000000e+00 : f32
    %28 = vector.broadcast %cst_19 : f32 to vector<128x48xf32>
    %29 = arith.maximumf %27, %28 : vector<128x48xf32>
    %30 = arith.truncf %29 : vector<128x48xf32> to vector<128x48xbf16>
    %c0_20 = arith.constant 0 : index
    %c0_21 = arith.constant 0 : index
    %31 = vector.load %arg8[%c0_20, %c0_21] : memref<48x56xbf16, #tpu.memory_space<vmem>>, vector<48x56xbf16>
    %cst_22 = arith.constant dense<0.000000e+00> : vector<128x56xf32>
    %32 = tpu.matmul %30, %31, %cst_22 {dimension_numbers = #tpu.dot_dimension_numbers<[1], [0], [0], [1], [0, 0, 1, 1], [], []>} : vector<128x48xbf16>, vector<48x56xbf16>, vector<128x56xf32> -> vector<128x56xf32>
    %c0_23 = arith.constant 0 : index
    %c0_24 = arith.constant 0 : index
    %33 = vector.load %arg9[%c0_23, %c0_24] : memref<1x56xf32, #tpu.memory_space<vmem>>, vector<1x56xf32>
    %34 = vector.broadcast %33 : vector<1x56xf32> to vector<128x56xf32>
    %35 = arith.addf %32, %34 : vector<128x56xf32>
    %36 = vector.extract_strided_slice %35 {offsets = [0, 0], sizes = [128, 28], strides = [1, 1]} : vector<128x56xf32> to vector<128x28xf32>
    %37 = vector.extract_strided_slice %35 {offsets = [0, 28], sizes = [128, 28], strides = [1, 1]} : vector<128x56xf32> to vector<128x28xf32>
    %38 = arith.negf %37 : vector<128x28xf32>
    %39 = math.exp %38 : vector<128x28xf32>
    %cst_25 = arith.constant 1.000000e+00 : f32
    %40 = vector.broadcast %cst_25 : f32 to vector<128x28xf32>
    %41 = arith.addf %40, %39 : vector<128x28xf32>
    %42 = arith.divf %40, %41 : vector<128x28xf32>
    %43 = arith.mulf %36, %42 : vector<128x28xf32>
    %c0_26 = arith.constant 0 : index
    %c0_27 = arith.constant 0 : index
    %44 = vector.load %arg4[%c0_26, %c0_27] : memref<128x4xf32, #tpu.memory_space<vmem>>, vector<128x4xf32>
    %45 = vector.extract_strided_slice %29 {offsets = [0, 0], sizes = [128, 4], strides = [1, 1]} : vector<128x48xf32> to vector<128x4xf32>
    %46 = arith.mulf %44, %45 : vector<128x4xf32>
    %c0_28 = arith.constant 0 : index
    %c0_29 = arith.constant 0 : index
    %47 = vector.load %arg10[%c0_28, %c0_29] : memref<128x32xf32, #tpu.memory_space<vmem>>, vector<128x28xf32>
    tpu.vector_store %arg10[%c0_28, %c0_29], %43 {strides = array<i32>} : memref<128x32xf32, #tpu.memory_space<vmem>>, vector<128x28xf32>,
    %c0_30 = arith.constant 0 : index
    %c28 = arith.constant 28 : index
    %48 = vector.load %arg10[%c0_30, %c28] : memref<128x32xf32, #tpu.memory_space<vmem>>, vector<128x4xf32>
    tpu.vector_store %arg10[%c0_30, %c28], %46 {strides = array<i32>} : memref<128x32xf32, #tpu.memory_space<vmem>>, vector<128x4xf32>,
    return
  }
  func.func @transform_0(%arg0: i32) -> (i32, i32) {
    %c0_i32 = arith.constant 0 : i32
    %c0_i32_0 = arith.constant 0 : i32
    return %arg0, %c0_i32 : i32, i32
  }
  func.func @transform_1(%arg0: i32) -> (i32, i32) {
    %c0_i32 = arith.constant 0 : i32
    %c0_i32_0 = arith.constant 0 : i32
    %c0_i32_1 = arith.constant 0 : i32
    return %c0_i32, %c0_i32_0 : i32, i32
  }
  func.func @transform_2(%arg0: i32) -> (i32, i32) {
    %c0_i32 = arith.constant 0 : i32
    %c0_i32_0 = arith.constant 0 : i32
    %c0_i32_1 = arith.constant 0 : i32
    return %c0_i32, %c0_i32_0 : i32, i32
  }
  func.func @transform_3(%arg0: i32) -> (i32, i32) {
    %c0_i32 = arith.constant 0 : i32
    %c0_i32_0 = arith.constant 0 : i32
    %c0_i32_1 = arith.constant 0 : i32
    return %c0_i32, %c0_i32_0 : i32, i32
  }
  func.func @transform_4(%arg0: i32) -> (i32, i32) {
    %c0_i32 = arith.constant 0 : i32
    %c0_i32_0 = arith.constant 0 : i32
    %c0_i32_1 = arith.constant 0 : i32
    return %c0_i32, %c0_i32_0 : i32, i32
  }
  func.func @transform_5(%arg0: i32) -> (i32, i32) {
    %c0_i32 = arith.constant 0 : i32
    %c0_i32_0 = arith.constant 0 : i32
    %c0_i32_1 = arith.constant 0 : i32
    return %c0_i32, %c0_i32_0 : i32, i32
  }
  func.func @transform_6(%arg0: i32) -> (i32, i32) {
    %c0_i32 = arith.constant 0 : i32
    %c0_i32_0 = arith.constant 0 : i32
    %c0_i32_1 = arith.constant 0 : i32
    return %c0_i32, %c0_i32_0 : i32, i32
  }
  func.func @transform_7(%arg0: i32) -> (i32, i32) {
    %c0_i32 = arith.constant 0 : i32
    %c0_i32_0 = arith.constant 0 : i32
    %c0_i32_1 = arith.constant 0 : i32
    return %c0_i32, %c0_i32_0 : i32, i32
  }
  func.func @transform_8(%arg0: i32) -> (i32, i32) {
    %c0_i32 = arith.constant 0 : i32
    %c0_i32_0 = arith.constant 0 : i32
    %c0_i32_1 = arith.constant 0 : i32
    return %c0_i32, %c0_i32_0 : i32, i32
  }
  func.func @transform_9(%arg0: i32) -> (i32, i32) {
    %c0_i32 = arith.constant 0 : i32
    %c0_i32_0 = arith.constant 0 : i32
    return %arg0, %c0_i32 : i32, i32
  }
}

</mosaic_0001>

<llo_original>
// kernel: st_conv_block_forward.1
$region0: #{st_conv_block_forward.1}
  #allocation0 [shape = 'u32[]', space=smem, size = 0x4, offset = 0x4, fixed_abs, tag = 'smem constant byte address 0x4 - core index']
  #allocation1 [shape = 'u32[144,128]{1,0:T(1,128)}', space=vmem, size = 0x12000, scoped, tag = 'internal scratch']
  #allocation2 [shape = 'bf16[128,48]{1,0:T(16,128)(2,1)}', space=vmem, size = 0x8000, scoped, tag = 'scratch operand']
  %s0 = inlined_call_operand.vmem [shape: bf16[256,64], index: 0, kind: input, shape index: {}]
  %s1 = inlined_call_operand.vmem [shape: bf16[128,128], index: 1, kind: input, shape index: {}]
  %s2 = inlined_call_operand.vmem [shape: f32[128,4], index: 2, kind: input, shape index: {}]
  %s3 = inlined_call_operand.vmem [shape: f32[128,4], index: 3, kind: input, shape index: {}]
  %s4 = inlined_call_operand.vmem [shape: bf16[64,88], index: 4, kind: input, shape index: {}]
  %s5 = inlined_call_operand.vmem [shape: f32[1,88], index: 5, kind: input, shape index: {}]
  %s6 = inlined_call_operand.vmem [shape: bf16[48,48], index: 6, kind: input, shape index: {}]
  %s7 = inlined_call_operand.vmem [shape: bf16[48,56], index: 7, kind: input, shape index: {}]
  %s8 = inlined_call_operand.vmem [shape: f32[1,56], index: 8, kind: input, shape index: {}]
  %s9 = inlined_call_operand.vmem [shape: f32[256,32], index: 9, kind: output, shape index: {}]
  %s10 = sld [smem:[#allocation0]]
  $region69: #{st_conv_block_forward.1} parent=0
    _
  %s12 = ssub.s32 1, %s10
  %s13 = scalar_select 0, %s12, %s10
  loop: start=0, step=1, limit=4
  $region2: #{st_conv_block_forward.1} parent=0 // loop_pre_header
    _
  $region3: #{st_conv_block_forward.1} parent=0 // loop_header
    %s15 = sphi 0, %s19
    %p16 = scmp.ge.s32.totalorder %s15, 4
    %s25 = sphi 0, %s27
    %s28 = sphi 0, %s25
    %s29 = sphi 0, %s28
    %s45 = sphi 0, %s29
    %s49 = sphi 0, %s49
    %s51 = sphi 0, %s49
    %s52 = sphi 0, %s51
    %s66 = sphi 0, %s52
    %s70 = sphi 0, %s70
    %s72 = sphi 0, %s70
    %s73 = sphi 0, %s72
    %s87 = sphi 0, %s73
    %s91 = sphi 0, %s91
    %s93 = sphi 0, %s91
    %s94 = sphi 0, %s93
    %s108 = sphi 0, %s94
    %s112 = sphi 0, %s112
    %s114 = sphi 0, %s112
    %s115 = sphi 0, %s114
    %s129 = sphi 0, %s115
    %s133 = sphi 0, %s133
    %s135 = sphi 0, %s133
    %s136 = sphi 0, %s135
    %s150 = sphi 0, %s136
    %s154 = sphi 0, %s154
    %s156 = sphi 0, %s154
    %s157 = sphi 0, %s156
    %s171 = sphi 0, %s157
    %s175 = sphi 0, %s175
    %s177 = sphi 0, %s175
    %s178 = sphi 0, %s177
    %s192 = sphi 0, %s178
    %s196 = sphi 0, %s196
    %s198 = sphi 0, %s196
    %s199 = sphi 0, %s198
    %s213 = sphi 0, %s199
    %s219 = sphi 0, %s221
    %s222 = sphi 0, %s219
    %s223 = sphi 0, %s222
    %s239 = sphi 0, %s223
  $region4: #{st_conv_block_forward.1} parent=0 // loop_header_branch
    %18 = sbr.rel (%p16) target = $region8
  $region5: #{st_conv_block_forward.1} parent=0 // loop_body
    %s20 = ssub.s32 %s15, 1
    %s21 = ssub.s32 %s15, 2
    %s22 = sadd.s32 %s15, 1
    %s23 = ssub.s32 %s15, %s22
    %p24 = scmp.eq.s32.totalorder %s23, 0
    %s26 = sadd.s32 %s25, 1
    %s27 = scalar_select %p24, %s25, %s26
    %p30 = pneg %p24
    %p31 = scmp.eq.s32.totalorder %s15, 1
    %p32 = por %p30, %p31
    %p33 = scmp.ne.s32.totalorder %s25, %s28
    %p34 = scmp.eq.s32.totalorder %s15, 0
    %p35 = por %p33, %p34
    %p36 = scmp.ne.s32.totalorder %s25, %s28
    %p37 = scmp.eq.s32.totalorder %s20, 1
    %p38 = por %p36, %p37
    %p39 = scmp.ne.s32.totalorder %s28, %s29
    %p40 = scmp.eq.s32.totalorder %s20, 0
    %p41 = por %p39, %p40
    %p42 = scmp.ne.s32.totalorder %s28, %s29
    %p43 = scmp.eq.s32.totalorder %s21, 1
    %p44 = por %p42, %p43
    %p46 = scmp.ne.s32.totalorder %s29, %s45
    %p47 = scmp.eq.s32.totalorder %s21, 0
    %p48 = por %p46, %p47
    %s50 = sadd.s32 %s49, 1
    %p53 = scmp.eq.s32.totalorder %s15, 1
    %p54 = scmp.ne.s32.totalorder %s49, %s51
    %p55 = scmp.eq.s32.totalorder %s15, 0
    %p56 = por %p54, %p55
    %p57 = scmp.ne.s32.totalorder %s49, %s51
    %p58 = scmp.eq.s32.totalorder %s20, 1
    %p59 = por %p57, %p58
    %p60 = scmp.ne.s32.totalorder %s51, %s52
    %p61 = scmp.eq.s32.totalorder %s20, 0
    %p62 = por %p60, %p61
    %p63 = scmp.ne.s32.totalorder %s51, %s52
    %p64 = scmp.eq.s32.totalorder %s21, 1
    %p65 = por %p63, %p64
    %p67 = scmp.ne.s32.totalorder %s52, %s66
    %p68 = scmp.eq.s32.totalorder %s21, 0
    %p69 = por %p67, %p68
    %s71 = sadd.s32 %s70, 1
    %p74 = scmp.eq.s32.totalorder %s15, 1
    %p75 = scmp.ne.s32.totalorder %s70, %s72
    %p76 = scmp.eq.s32.totalorder %s15, 0
    %p77 = por %p75, %p76
    %p78 = scmp.ne.s32.totalorder %s70, %s72
    %p79 = scmp.eq.s32.totalorder %s20, 1
    %p80 = por %p78, %p79
    %p81 = scmp.ne.s32.totalorder %s72, %s73
    %p82 = scmp.eq.s32.totalorder %s20, 0
    %p83 = por %p81, %p82
    %p84 = scmp.ne.s32.totalorder %s72, %s73
    %p85 = scmp.eq.s32.totalorder %s21, 1
    %p86 = por %p84, %p85
    %p88 = scmp.ne.s32.totalorder %s73, %s87
    %p89 = scmp.eq.s32.totalorder %s21, 0
    %p90 = por %p88, %p89
    %s92 = sadd.s32 %s91, 1
    %p95 = scmp.eq.s32.totalorder %s15, 1
    %p96 = scmp.ne.s32.totalorder %s91, %s93
    %p97 = scmp.eq.s32.totalorder %s15, 0
    %p98 = por %p96, %p97
    %p99 = scmp.ne.s32.totalorder %s91, %s93
    %p100 = scmp.eq.s32.totalorder %s20, 1
    %p101 = por %p99, %p100
    %p102 = scmp.ne.s32.totalorder %s93, %s94
    %p103 = scmp.eq.s32.totalorder %s20, 0
    %p104 = por %p102, %p103
    %p105 = scmp.ne.s32.totalorder %s93, %s94
    %p106 = scmp.eq.s32.totalorder %s21, 1
    %p107 = por %p105, %p106
    %p109 = scmp.ne.s32.totalorder %s94, %s108
    %p110 = scmp.eq.s32.totalorder %s21, 0
    %p111 = por %p109, %p110
    %s113 = sadd.s32 %s112, 1
    %p116 = scmp.eq.s32.totalorder %s15, 1
    %p117 = scmp.ne.s32.totalorder %s112, %s114
    %p118 = scmp.eq.s32.totalorder %s15, 0
    %p119 = por %p117, %p118
    %p120 = scmp.ne.s32.totalorder %s112, %s114
    %p121 = scmp.eq.s32.totalorder %s20, 1
    %p122 = por %p120, %p121
    %p123 = scmp.ne.s32.totalorder %s114, %s115
    %p124 = scmp.eq.s32.totalorder %s20, 0
    %p125 = por %p123, %p124
    %p126 = scmp.ne.s32.totalorder %s114, %s115
    %p127 = scmp.eq.s32.totalorder %s21, 1
    %p128 = por %p126, %p127
    %p130 = scmp.ne.s32.totalorder %s115, %s129
    %p131 = scmp.eq.s32.totalorder %s21, 0
    %p132 = por %p130, %p131
    %s134 = sadd.s32 %s133, 1
    %p137 = scmp.eq.s32.totalorder %s15, 1
    %p138 = scmp.ne.s32.totalorder %s133, %s135
    %p139 = scmp.eq.s32.totalorder %s15, 0
    %p140 = por %p138, %p139
    %p141 = scmp.ne.s32.totalorder %s133, %s135
    %p142 = scmp.eq.s32.totalorder %s20, 1
    %p143 = por %p141, %p142
    %p144 = scmp.ne.s32.totalorder %s135, %s136
    %p145 = scmp.eq.s32.totalorder %s20, 0
    %p146 = por %p144, %p145
    %p147 = scmp.ne.s32.totalorder %s135, %s136
    %p148 = scmp.eq.s32.totalorder %s21, 1
    %p149 = por %p147, %p148
    %p151 = scmp.ne.s32.totalorder %s136, %s150
    %p152 = scmp.eq.s32.totalorder %s21, 0
    %p153 = por %p151, %p152
    %s155 = sadd.s32 %s154, 1
    %p158 = scmp.eq.s32.totalorder %s15, 1
    %p159 = scmp.ne.s32.totalorder %s154, %s156
    %p160 = scmp.eq.s32.totalorder %s15, 0
    %p161 = por %p159, %p160
    %p162 = scmp.ne.s32.totalorder %s154, %s156
    %p163 = scmp.eq.s32.totalorder %s20, 1
    %p164 = por %p162, %p163
    %p165 = scmp.ne.s32.totalorder %s156, %s157
    %p166 = scmp.eq.s32.totalorder %s20, 0
    %p167 = por %p165, %p166
    %p168 = scmp.ne.s32.totalorder %s156, %s157
    %p169 = scmp.eq.s32.totalorder %s21, 1
    %p170 = por %p168, %p169
    %p172 = scmp.ne.s32.totalorder %s157, %s171
    %p173 = scmp.eq.s32.totalorder %s21, 0
    %p174 = por %p172, %p173
    %s176 = sadd.s32 %s175, 1
    %p179 = scmp.eq.s32.totalorder %s15, 1
    %p180 = scmp.ne.s32.totalorder %s175, %s177
    %p181 = scmp.eq.s32.totalorder %s15, 0
    %p182 = por %p180, %p181
    %p183 = scmp.ne.s32.totalorder %s175, %s177
    %p184 = scmp.eq.s32.totalorder %s20, 1
    %p185 = por %p183, %p184
    %p186 = scmp.ne.s32.totalorder %s177, %s178
    %p187 = scmp.eq.s32.totalorder %s20, 0
    %p188 = por %p186, %p187
    %p189 = scmp.ne.s32.totalorder %s177, %s178
    %p190 = scmp.eq.s32.totalorder %s21, 1
    %p191 = por %p189, %p190
    %p193 = scmp.ne.s32.totalorder %s178, %s192
    %p194 = scmp.eq.s32.totalorder %s21, 0
    %p195 = por %p193, %p194
    %s197 = sadd.s32 %s196, 1
    %p200 = scmp.eq.s32.totalorder %s15, 1
    %p201 = scmp.ne.s32.totalorder %s196, %s198
    %p202 = scmp.eq.s32.totalorder %s15, 0
    %p203 = por %p201, %p202
    %p204 = scmp.ne.s32.totalorder %s196, %s198
    %p205 = scmp.eq.s32.totalorder %s20, 1
    %p206 = por %p204, %p205
    %p207 = scmp.ne.s32.totalorder %s198, %s199
    %p208 = scmp.eq.s32.totalorder %s20, 0
    %p209 = por %p207, %p208
    %p210 = scmp.ne.s32.totalorder %s198, %s199
    %p211 = scmp.eq.s32.totalorder %s21, 1
    %p212 = por %p210, %p211
    %p214 = scmp.ne.s32.totalorder %s199, %s213
    %p215 = scmp.eq.s32.totalorder %s21, 0
    %p216 = por %p214, %p215
    %s217 = ssub.s32 %s15, %s22
    %p218 = scmp.eq.s32.totalorder %s217, 0
    %s220 = sadd.s32 %s219, 1
    %s221 = scalar_select %p218, %s219, %s220
    %p224 = pneg %p218
    %p225 = scmp.eq.s32.totalorder %s15, 1
    %p226 = por %p224, %p225
    %p227 = scmp.ne.s32.totalorder %s219, %s222
    %p228 = scmp.eq.s32.totalorder %s15, 0
    %p229 = por %p227, %p228
    %p230 = scmp.ne.s32.totalorder %s219, %s222
    %p231 = scmp.eq.s32.totalorder %s20, 1
    %p232 = por %p230, %p231
    %p233 = scmp.ne.s32.totalorder %s222, %s223
    %p234 = scmp.eq.s32.totalorder %s20, 0
    %p235 = por %p233, %p234
    %p236 = scmp.ne.s32.totalorder %s222, %s223
    %p237 = scmp.eq.s32.totalorder %s21, 1
    %p238 = por %p236, %p237
    %p240 = scmp.ne.s32.totalorder %s223, %s239
    %p241 = scmp.eq.s32.totalorder %s21, 0
    %p242 = por %p240, %p241
    %p243 = scmp.le.s32.totalorder 1, %s15
    %p244 = scmp.lt.s32.totalorder %s15, 3
    %p245 = pnand %p243, %p244
    %p246 = pneg %p245
    // Predicated region
    $region9: #{st_conv_block_forward.1} parent=5 // pred_check
      _
    $region10: #{st_conv_block_forward.1} parent=5 // pred_check_branch
      %248 = sbr.rel (%p245) target = $region12
    $region11: #{st_conv_block_forward.1} parent=5 // pred_region
      %s249 = ssub.s32 %s15, 1
      // Predicated region
      $region13: #{st_conv_block_forward.1} parent=11 // pred_check
        %p250 = pneg %p62
      $region14: #{st_conv_block_forward.1} parent=11 // pred_check_branch
        %252 = sbr.rel (%p250) target = $region16
      $region15: #{st_conv_block_forward.1} parent=11 // pred_region
        _
      $region16: #{st_conv_block_forward.1} parent=11 // pred_fallthru
        _
      // Predicated region
      $region17: #{st_conv_block_forward.1} parent=11 // pred_check
        %p253 = pneg %p83
      $region18: #{st_conv_block_forward.1} parent=11 // pred_check_branch
        %255 = sbr.rel (%p253) target = $region20
      $region19: #{st_conv_block_forward.1} parent=11 // pred_region
        _
      $region20: #{st_conv_block_forward.1} parent=11 // pred_fallthru
        _
      // Predicated region
      $region21: #{st_conv_block_forward.1} parent=11 // pred_check
        %p256 = pneg %p104
      $region22: #{st_conv_block_forward.1} parent=11 // pred_check_branch
        %258 = sbr.rel (%p256) target = $region24
      $region23: #{st_conv_block_forward.1} parent=11 // pred_region
        _
      $region24: #{st_conv_block_forward.1} parent=11 // pred_fallthru
        _
      // Predicated region
      $region25: #{st_conv_block_forward.1} parent=11 // pred_check
        %p259 = pneg %p125
      $region26: #{st_conv_block_forward.1} parent=11 // pred_check_branch
        %261 = sbr.rel (%p259) target = $region28
      $region27: #{st_conv_block_forward.1} parent=11 // pred_region
        _
      $region28: #{st_conv_block_forward.1} parent=11 // pred_fallthru
        _
      // Predicated region
      $region29: #{st_conv_block_forward.1} parent=11 // pred_check
        %p262 = pneg %p146
      $region30: #{st_conv_block_forward.1} parent=11 // pred_check_branch
        %264 = sbr.rel (%p262) target = $region32
      $region31: #{st_conv_block_forward.1} parent=11 // pred_region
        _
      $region32: #{st_conv_block_forward.1} parent=11 // pred_fallthru
        _
      // Predicated region
      $region33: #{st_conv_block_forward.1} parent=11 // pred_check
        %p265 = pneg %p167
      $region34: #{st_conv_block_forward.1} parent=11 // pred_check_branch
        %267 = sbr.rel (%p265) target = $region36
      $region35: #{st_conv_block_forward.1} parent=11 // pred_region
        _
      $region36: #{st_conv_block_forward.1} parent=11 // pred_fallthru
        _
      // Predicated region
      $region37: #{st_conv_block_forward.1} parent=11 // pred_check
        %p268 = pneg %p188
      $region38: #{st_conv_block_forward.1} parent=11 // pred_check_branch
        %270 = sbr.rel (%p268) target = $region40
      $region39: #{st_conv_block_forward.1} parent=11 // pred_region
        _
      $region40: #{st_conv_block_forward.1} parent=11 // pred_fallthru
        _
      // Predicated region
      $region41: #{st_conv_block_forward.1} parent=11 // pred_check
        %p271 = pneg %p209
      $region42: #{st_conv_block_forward.1} parent=11 // pred_check_branch
        %273 = sbr.rel (%p271) target = $region44
      $region43: #{st_conv_block_forward.1} parent=11 // pred_region
        _
      $region44: #{st_conv_block_forward.1} parent=11 // pred_fallthru
        _
    $region12: #{st_conv_block_forward.1} parent=5 // pred_fallthru
      _
    %p274 = scmp.lt.s32.totalorder %s15, 2
    // Predicated region
    $region45: #{st_conv_block_forward.1} parent=5 // pred_check
      %p275 = pneg %p274
    $region46: #{st_conv_block_forward.1} parent=5 // pred_check_branch
      %277 = sbr.rel (%p275) target = $region48
    $region47: #{st_conv_block_forward.1} parent=5 // pred_region
      // Predicated region
      $region49: #{st_conv_block_forward.1} parent=47 // pred_check
        %p278 = pneg %p35
      $region50: #{st_conv_block_forward.1} parent=47 // pred_check_branch
        %280 = sbr.rel (%p278) target = $region52
      $region51: #{st_conv_block_forward.1} parent=47 // pred_region
        %s281 = smul.u32 16, %s15
        %p282 = scmp.lt.s32.totalorder %s281, 31
        %s283 = scalar_select %p282, %s281, 31
        %s284 = smul.addr %s283, 4
        %s285 = scalar_lea.vmem %s0, %s284
        %s286 = smul.u32 16, %s15
      $region52: #{st_conv_block_forward.1} parent=47 // pred_fallthru
        _
    $region48: #{st_conv_block_forward.1} parent=5 // pred_fallthru
      _
    %p287 = scmp.le.s32.totalorder 1, %s15
    %p288 = scmp.lt.s32.totalorder %s15, 3
    %p289 = pnand %p287, %p288
    %p290 = pneg %p289
    // Predicated region
    $region53: #{st_conv_block_forward.1} parent=5 // pred_check
      _
    $region54: #{st_conv_block_forward.1} parent=5 // pred_check_branch
      %292 = sbr.rel (%p289) target = $region56
    $region55: #{st_conv_block_forward.1} parent=5 // pred_region
      %s293 = ssub.s32 %s15, 1
      %s294 = smul.u32 16, %s20
      %p295 = scmp.lt.s32.totalorder %s294, 31
      %s296 = scalar_select %p295, %s294, 31
      %s297 = smul.addr %s296, 4
      %s298 = scalar_lea.vmem %s0, %s297
      %p299 = pneg %p41
      %p300 = pneg %p38
      %p301 = pneg %p62
      %p302 = pneg %p59
      %p303 = pneg %p83
      %p304 = pneg %p80
      %p305 = pneg %p104
      %p306 = pneg %p101
      %p307 = pneg %p125
      %p308 = pneg %p122
      %p309 = pneg %p146
      %p310 = pneg %p143
      %p311 = pneg %p167
      %p312 = pneg %p164
      %p313 = pneg %p188
      %p314 = pneg %p185
      %p315 = pneg %p209
      %p316 = pneg %p206
      %p317 = pneg %p235
      %p318 = pneg %p232
      %s319 = smul.u32 16, %s20
      %p320 = scmp.lt.s32.totalorder %s319, 31
      %s321 = scalar_select %p320, %s319, 31
      %s322 = smul.addr %s321, 8
      %s323 = scalar_lea.vmem %s9, %s322
      %s324 = smul.u32 16, %s20
      %p325 = scmp.lt.s32.totalorder %s324, 31
      %s326 = scalar_select %p325, %s324, 31
      %s327 = smul.addr %s326, 4
      %s328 = scalar_lea.vmem %s0, %s327
      %s329 = smul.u32 16, %s20
      %s330 = smul.u32 16, %s20
      %p331 = scmp.lt.s32.totalorder %s330, 31
      %s332 = scalar_select %p331, %s330, 31
      %s333 = smul.addr %s332, 8
      %s334 = scalar_lea.vmem %s9, %s333
      %s335 = smul.u32 16, %s20
      %v337 = vld [vmem:[%s328] sm:$0xf]
      %v338 = vld [vmem:[%s328 + $0x4] sm:$0xf]
      %v339 = vld [vmem:[%s328 + $0x8] sm:$0xf]
      %v340 = vld [vmem:[%s328 + $0xc] sm:$0xf]
      %v341 = vld [vmem:[%s328 + $0x10] sm:$0xf]
      %v342 = vld [vmem:[%s328 + $0x14] sm:$0xf]
      %v343 = vld [vmem:[%s328 + $0x18] sm:$0xf]
      %v344 = vld [vmem:[%s328 + $0x1c] sm:$0xf]
      %v345 = vld [vmem:[%s328 + $0x20] sm:$0xf]
      %v346 = vld [vmem:[%s328 + $0x24] sm:$0xf]
      %v347 = vld [vmem:[%s328 + $0x28] sm:$0xf]
      %v348 = vld [vmem:[%s328 + $0x2c] sm:$0xf]
      %v349 = vld [vmem:[%s328 + $0x30] sm:$0xf]
      %v350 = vld [vmem:[%s328 + $0x34] sm:$0xf]
      %v351 = vld [vmem:[%s328 + $0x38] sm:$0xf]
      %v352 = vld [vmem:[%s328 + $0x3c] sm:$0xf]
      %v353 = vld [vmem:[%s4] sm:$0xf]
      %v354 = vld [vmem:[%s4 + $0x4] sm:$0xf]
      %v355 = vld [vmem:[%s4 + $0x8] sm:$0xf]
      %v356 = vld [vmem:[%s4 + $0xc] sm:$0xf]
      %v357 = vld [vmem:[%s4 + $0x10] sm:$0xf]
      %v358 = vld [vmem:[%s4 + $0x14] sm:$0xf]
      %v359 = vld [vmem:[%s4 + $0x18] sm:$0xf]
      %v360 = vld [vmem:[%s4 + $0x1c] sm:$0xf]
      %v361 = vld [vmem:[%s5] sm:$0x1]
      %v363 = vlaneseq
      %v364 = vshrl.u32 %v363, 7
      %v365 = vsub.s32 0, %v364
      %v366 = vrot.slane %v361, %v365
      %v384 = vunpack.c.l.b16 %v337
      %v385 = vunpack.c.l.b16 %v338
      %v386 = vunpack.c.l.b16 %v339
      %v387 = vunpack.c.l.b16 %v340
      %v388 = vunpack.c.l.b16 %v341
      %v389 = vunpack.c.l.b16 %v342
      %v390 = vunpack.c.l.b16 %v343
      %v391 = vunpack.c.l.b16 %v344
      %v392 = vunpack.c.l.b16 %v345
      %v393 = vunpack.c.l.b16 %v346
      %v394 = vunpack.c.l.b16 %v347
      %v395 = vunpack.c.l.b16 %v348
      %v396 = vunpack.c.l.b16 %v349
      %v397 = vunpack.c.l.b16 %v350
      %v398 = vunpack.c.l.b16 %v351
      %v399 = vunpack.c.l.b16 %v352
      %v400 = vpack.c.b16 %v385, %v384
      %v401 = vpack.c.b16 %v387, %v386
      %v402 = vpack.c.b16 %v389, %v388
      %v403 = vpack.c.b16 %v391, %v390
      %v404 = vpack.c.b16 %v393, %v392
      %v405 = vpack.c.b16 %v395, %v394
      %v406 = vpack.c.b16 %v397, %v396
      %v407 = vpack.c.b16 %v399, %v398
      %v416 = vunpack.c.l.b16 %v353
      %v417 = vunpack.c.l.b16 %v354
      %v418 = vunpack.c.l.b16 %v355
      %v419 = vunpack.c.l.b16 %v356
      %v420 = vunpack.c.l.b16 %v357
      %v421 = vunpack.c.l.b16 %v358
      %v422 = vunpack.c.l.b16 %v359
      %v423 = vunpack.c.l.b16 %v360
      %v424 = vpack.c.b16 %v417, %v416
      %v425 = vpack.c.b16 %v419, %v418
      %v426 = vpack.c.b16 %v421, %v420
      %v427 = vpack.c.b16 %v423, %v422
      %vm432 = vcmask 523264
      %v434 = vsel %vm432, %v400, 0
      %v437 = vsel %vm432, %v401, 0
      %v440 = vsel %vm432, %v402, 0
      %v443 = vsel %vm432, %v403, 0
      %v446 = vsel %vm432, %v404, 0
      %v449 = vsel %vm432, %v405, 0
      %v452 = vsel %vm432, %v406, 0
      %v455 = vsel %vm432, %v407, 0
      %457 = vmatprep.subr.bf16.mxu0 0
      %458 = vmatpush1.bf16.msra.mxu0 %v424
      %459 = vmatprep.subr.bf16.mxu0 0
      %460 = vmatpush1.bf16.msra.mxu0 %v425
      %461 = vmatprep.subr.bf16.mxu0 0
      %462 = vmatpush1.bf16.msra.mxu0 %v426
      %463 = vmatprep.subr.bf16.mxu0 0
      %464 = vmatpush1.bf16.msra.mxu0 %v427
      %465 = vmatprep.subr.bf16.mxu0 0
      %466 = vmatpush1.bf16.msra.mxu0 0
      %467 = vmatprep.subr.bf16.mxu0 0
      %468 = vmatpush1.bf16.msra.mxu0 0
      %469 = vmatprep.subr.bf16.mxu0 0
      %470 = vmatpush1.bf16.msra.mxu0 0
      %471 = vmatprep.subr.bf16.mxu0 0
      %472 = vmatpush1.bf16.msra.mxu0 0
      %473 = vmatprep.subr.bf16.mxu0 0
      %474 = vmatpush1.bf16.msra.mxu0 0
      %475 = vmatprep.subr.bf16.mxu0 0
      %476 = vmatpush1.bf16.msra.mxu0 0
      %477 = vmatprep.subr.bf16.mxu0 0
      %478 = vmatpush1.bf16.msra.mxu0 0
      %479 = vmatprep.subr.bf16.mxu0 0
      %480 = vmatpush1.bf16.msra.mxu0 0
      %481 = vmatprep.subr.bf16.mxu0 0
      %482 = vmatpush1.bf16.msra.mxu0 0
      %483 = vmatprep.subr.bf16.mxu0 0
      %484 = vmatpush1.bf16.msra.mxu0 0
      %485 = vmatprep.subr.bf16.mxu0 0
      %486 = vmatpush1.bf16.msra.mxu0 0
      %487 = vmatprep.subr.bf16.mxu0 0
      %488 = vmatpush1.bf16.msra.mxu0 0
      %489 = vmatprep.mubr.bf16.mxu0 0
      %490 = vmatmul.mubr.bf16.gmra.mrb[0].mxu0 %v434
      %v491 = vpop.f32.mrb[0].mxu0
      %v492 = vadd.f32 %v366, %v491
      %v493 = vpop.f32.mrb[0].mxu0
      %v494 = vpop.f32.mrb[0].mxu0
      %v495 = vadd.f32 %v366, %v494
      %v496 = vpop.f32.mrb[0].mxu0
      %497 = vmatprep.mubr.bf16.mxu0 0
      %498 = vmatmul.mubr.bf16.gmra.mrb[0].mxu0 %v437
      %v499 = vpop.f32.mrb[0].mxu0
      %v500 = vadd.f32 %v366, %v499
      %v501 = vpop.f32.mrb[0].mxu0
      %v502 = vpop.f32.mrb[0].mxu0
      %v503 = vadd.f32 %v366, %v502
      %v504 = vpop.f32.mrb[0].mxu0
      %505 = vmatprep.mubr.bf16.mxu0 0
      %506 = vmatmul.mubr.bf16.gmra.mrb[0].mxu0 %v440
      %v507 = vpop.f32.mrb[0].mxu0
      %v508 = vadd.f32 %v366, %v507
      %v509 = vpop.f32.mrb[0].mxu0
      %v510 = vpop.f32.mrb[0].mxu0
      %v511 = vadd.f32 %v366, %v510
      %v512 = vpop.f32.mrb[0].mxu0
      %513 = vmatprep.mubr.bf16.mxu0 0
      %514 = vmatmul.mubr.bf16.gmra.mrb[0].mxu0 %v443
      %v515 = vpop.f32.mrb[0].mxu0
      %v516 = vadd.f32 %v366, %v515
      %v517 = vpop.f32.mrb[0].mxu0
      %v518 = vpop.f32.mrb[0].mxu0
      %v519 = vadd.f32 %v366, %v518
      %v520 = vpop.f32.mrb[0].mxu0
      %521 = vmatprep.mubr.bf16.mxu0 0
      %522 = vmatmul.mubr.bf16.gmra.mrb[0].mxu0 %v446
      %v523 = vpop.f32.mrb[0].mxu0
      %v524 = vadd.f32 %v366, %v523
      %v525 = vpop.f32.mrb[0].mxu0
      %v526 = vpop.f32.mrb[0].mxu0
      %v527 = vadd.f32 %v366, %v526
      %v528 = vpop.f32.mrb[0].mxu0
      %529 = vmatprep.mubr.bf16.mxu0 0
      %530 = vmatmul.mubr.bf16.gmra.mrb[0].mxu0 %v449
      %v531 = vpop.f32.mrb[0].mxu0
      %v532 = vadd.f32 %v366, %v531
      %v533 = vpop.f32.mrb[0].mxu0
      %v534 = vpop.f32.mrb[0].mxu0
      %v535 = vadd.f32 %v366, %v534
      %v536 = vpop.f32.mrb[0].mxu0
      %537 = vmatprep.mubr.bf16.mxu0 0
      %538 = vmatmul.mubr.bf16.gmra.mrb[0].mxu0 %v452
      %v539 = vpop.f32.mrb[0].mxu0
      %v540 = vadd.f32 %v366, %v539
      %v541 = vpop.f32.mrb[0].mxu0
      %v542 = vpop.f32.mrb[0].mxu0
      %v543 = vadd.f32 %v366, %v542
      %v544 = vpop.f32.mrb[0].mxu0
      %545 = vmatprep.mubr.bf16.mxu0 0
      %546 = vmatmul.mubr.bf16.gmra.mrb[0].mxu0 %v455
      %v547 = vpop.f32.mrb[0].mxu0
      %v548 = vadd.f32 %v366, %v547
      %v549 = vpop.f32.mrb[0].mxu0
      %v550 = vpop.f32.mrb[0].mxu0
      %v551 = vadd.f32 %v366, %v550
      %v552 = vpop.f32.mrb[0].mxu0
      %553 = vdwg.mxu0
      %v554 = vxor.u32 %v492, 2147483648
      %v555 = vxor.u32 %v495, 2147483648
      %v556 = vxor.u32 %v500, 2147483648
      %v557 = vxor.u32 %v503, 2147483648
      %v558 = vxor.u32 %v508, 2147483648
      %v559 = vxor.u32 %v511, 2147483648
      %v560 = vxor.u32 %v516, 2147483648
      %v561 = vxor.u32 %v519, 2147483648
      %v562 = vxor.u32 %v524, 2147483648
      %v563 = vxor.u32 %v527, 2147483648
      %v564 = vxor.u32 %v532, 2147483648
      %v565 = vxor.u32 %v535, 2147483648
      %v566 = vxor.u32 %v540, 2147483648
      %v567 = vxor.u32 %v543, 2147483648
      %v568 = vxor.u32 %v548, 2147483648
      %v569 = vxor.u32 %v551, 2147483648
      %v570 = vmul.f32 %v554, 1.442695
      %v571 = vpow.pop %v570
      %v572 = vmul.f32 %v555, 1.442695
      %v573 = vpow.pop %v572
      %v574 = vmul.f32 %v556, 1.442695
      %v575 = vpow.pop %v574
      %v576 = vmul.f32 %v557, 1.442695
      %v577 = vpow.pop %v576
      %v578 = vmul.f32 %v558, 1.442695
      %v579 = vpow.pop %v578
      %v580 = vmul.f32 %v559, 1.442695
      %v581 = vpow.pop %v580
      %v582 = vmul.f32 %v560, 1.442695
      %v583 = vpow.pop %v582
      %v584 = vmul.f32 %v561, 1.442695
      %v585 = vpow.pop %v584
      %v586 = vmul.f32 %v562, 1.442695
      %v587 = vpow.pop %v586
      %v588 = vmul.f32 %v563, 1.442695
      %v589 = vpow.pop %v588
      %v590 = vmul.f32 %v564, 1.442695
      %v591 = vpow.pop %v590
      %v592 = vmul.f32 %v565, 1.442695
      %v593 = vpow.pop %v592
      %v594 = vmul.f32 %v566, 1.442695
      %v595 = vpow.pop %v594
      %v596 = vmul.f32 %v567, 1.442695
      %v597 = vpow.pop %v596
      %v598 = vmul.f32 %v568, 1.442695
      %v599 = vpow.pop %v598
      %v600 = vmul.f32 %v569, 1.442695
      %v601 = vpow.pop %v600
      %v602 = vadd.f32 %v571, 1.0
      %v603 = vadd.f32 %v573, 1.0
      %v604 = vadd.f32 %v575, 1.0
      %v605 = vadd.f32 %v577, 1.0
      %v606 = vadd.f32 %v579, 1.0
      %v607 = vadd.f32 %v581, 1.0
      %v608 = vadd.f32 %v583, 1.0
      %v609 = vadd.f32 %v585, 1.0
      %v610 = vadd.f32 %v587, 1.0
      %v611 = vadd.f32 %v589, 1.0
      %v612 = vadd.f32 %v591, 1.0
      %v613 = vadd.f32 %v593, 1.0
      %v614 = vadd.f32 %v595, 1.0
      %v615 = vadd.f32 %v597, 1.0
      %v616 = vadd.f32 %v599, 1.0
      %v617 = vadd.f32 %v601, 1.0
      %v618 = vrcp.pop %v602
      %v619 = vmul.f32 1.0, %v618
      %v620 = vrcp.pop %v603
      %v621 = vmul.f32 1.0, %v620
      %v622 = vrcp.pop %v604
      %v623 = vmul.f32 1.0, %v622
      %v624 = vrcp.pop %v605
      %v625 = vmul.f32 1.0, %v624
      %v626 = vrcp.pop %v606
      %v627 = vmul.f32 1.0, %v626
      %v628 = vrcp.pop %v607
      %v629 = vmul.f32 1.0, %v628
      %v630 = vrcp.pop %v608
      %v631 = vmul.f32 1.0, %v630
      %v632 = vrcp.pop %v609
      %v633 = vmul.f32 1.0, %v632
      %v634 = vrcp.pop %v610
      %v635 = vmul.f32 1.0, %v634
      %v636 = vrcp.pop %v611
      %v637 = vmul.f32 1.0, %v636
      %v638 = vrcp.pop %v612
      %v639 = vmul.f32 1.0, %v638
      %v640 = vrcp.pop %v613
      %v641 = vmul.f32 1.0, %v640
      %v642 = vrcp.pop %v614
      %v643 = vmul.f32 1.0, %v642
      %v644 = vrcp.pop %v615
      %v645 = vmul.f32 1.0, %v644
      %v646 = vrcp.pop %v616
      %v647 = vmul.f32 1.0, %v646
      %v648 = vrcp.pop %v617
      %v649 = vmul.f32 1.0, %v648
      %666 = vrot.lane.b32.xlu0 %v619, 84
      %v667 = vpop.permute.xlu0 %666
      %668 = vrot.lane.b32.xlu0 %v621, 84
      %v669 = vpop.permute.xlu0 %668
      %670 = vrot.lane.b32.xlu0 %v623, 84
      %v671 = vpop.permute.xlu0 %670
      %672 = vrot.lane.b32.xlu0 %v625, 84
      %v673 = vpop.permute.xlu0 %672
      %674 = vrot.lane.b32.xlu0 %v627, 84
      %v675 = vpop.permute.xlu0 %674
      %676 = vrot.lane.b32.xlu0 %v629, 84
      %v677 = vpop.permute.xlu0 %676
      %678 = vrot.lane.b32.xlu0 %v631, 84
      %v679 = vpop.permute.xlu0 %678
      %680 = vrot.lane.b32.xlu0 %v633, 84
      %v681 = vpop.permute.xlu0 %680
      %682 = vrot.lane.b32.xlu0 %v635, 84
      %v683 = vpop.permute.xlu0 %682
      %684 = vrot.lane.b32.xlu0 %v637, 84
      %v685 = vpop.permute.xlu0 %684
      %686 = vrot.lane.b32.xlu0 %v639, 84
      %v687 = vpop.permute.xlu0 %686
      %688 = vrot.lane.b32.xlu0 %v641, 84
      %v689 = vpop.permute.xlu0 %688
      %690 = vrot.lane.b32.xlu0 %v643, 84
      %v691 = vpop.permute.xlu0 %690
      %692 = vrot.lane.b32.xlu0 %v645, 84
      %v693 = vpop.permute.xlu0 %692
      %694 = vrot.lane.b32.xlu0 %v647, 84
      %v695 = vpop.permute.xlu0 %694
      %696 = vrot.lane.b32.xlu0 %v649, 84
      %v697 = vpop.permute.xlu0 %696
      %v714 = vmul.f32 %v492, %v667
      %v715 = vmul.f32 %v495, %v669
      %v716 = vmul.f32 %v500, %v671
      %v717 = vmul.f32 %v503, %v673
      %v718 = vmul.f32 %v508, %v675
      %v719 = vmul.f32 %v511, %v677
      %v720 = vmul.f32 %v516, %v679
      %v721 = vmul.f32 %v519, %v681
      %v722 = vmul.f32 %v524, %v683
      %v723 = vmul.f32 %v527, %v685
      %v724 = vmul.f32 %v532, %v687
      %v725 = vmul.f32 %v535, %v689
      %v726 = vmul.f32 %v540, %v691
      %v727 = vmul.f32 %v543, %v693
      %v728 = vmul.f32 %v548, %v695
      %v729 = vmul.f32 %v551, %v697
      %v730 = vld [vmem:[%s2] sm:$0xff]
      %v731 = vld [vmem:[%s2 + $0x8] sm:$0xff]
      %v732 = vld [vmem:[%s2 + $0x10] sm:$0xff]
      %v733 = vld [vmem:[%s2 + $0x18] sm:$0xff]
      %v734 = vld [vmem:[%s2 + $0x20] sm:$0xff]
      %v735 = vld [vmem:[%s2 + $0x28] sm:$0xff]
      %v736 = vld [vmem:[%s2 + $0x30] sm:$0xff]
      %v737 = vld [vmem:[%s2 + $0x38] sm:$0xff]
      %v738 = vld [vmem:[%s2 + $0x40] sm:$0xff]
      %v739 = vld [vmem:[%s2 + $0x48] sm:$0xff]
      %v740 = vld [vmem:[%s2 + $0x50] sm:$0xff]
      %v741 = vld [vmem:[%s2 + $0x58] sm:$0xff]
      %v742 = vld [vmem:[%s2 + $0x60] sm:$0xff]
      %v743 = vld [vmem:[%s2 + $0x68] sm:$0xff]
      %v744 = vld [vmem:[%s2 + $0x70] sm:$0xff]
      %v745 = vld [vmem:[%s2 + $0x78] sm:$0xff]
      %v746 = vunpack.c.l.bf16 %v337
      %v747 = vunpack.c.l.bf16 %v338
      %v748 = vunpack.c.l.bf16 %v339
      %v749 = vunpack.c.l.bf16 %v340
      %v750 = vunpack.c.l.bf16 %v341
      %v751 = vunpack.c.l.bf16 %v342
      %v752 = vunpack.c.l.bf16 %v343
      %v753 = vunpack.c.l.bf16 %v344
      %v754 = vunpack.c.l.bf16 %v345
      %v755 = vunpack.c.l.bf16 %v346
      %v756 = vunpack.c.l.bf16 %v347
      %v757 = vunpack.c.l.bf16 %v348
      %v758 = vunpack.c.l.bf16 %v349
      %v759 = vunpack.c.l.bf16 %v350
      %v760 = vunpack.c.l.bf16 %v351
      %v761 = vunpack.c.l.bf16 %v352
      %v762 = vmul.f32 %v730, %v746
      %v763 = vmul.f32 %v731, %v747
      %v764 = vmul.f32 %v732, %v748
      %v765 = vmul.f32 %v733, %v749
      %v766 = vmul.f32 %v734, %v750
      %v767 = vmul.f32 %v735, %v751
      %v768 = vmul.f32 %v736, %v752
      %v769 = vmul.f32 %v737, %v753
      %v770 = vmul.f32 %v738, %v754
      %v771 = vmul.f32 %v739, %v755
      %v772 = vmul.f32 %v740, %v756
      %v773 = vmul.f32 %v741, %v757
      %v774 = vmul.f32 %v742, %v758
      %v775 = vmul.f32 %v743, %v759
      %v776 = vmul.f32 %v744, %v760
      %v777 = vmul.f32 %v745, %v761
      %v778 = vpack.c.bf16 %v715, %v714
      %v779 = vpack.c.bf16 %v717, %v716
      %v780 = vpack.c.bf16 %v719, %v718
      %v781 = vpack.c.bf16 %v721, %v720
      %v782 = vpack.c.bf16 %v723, %v722
      %v783 = vpack.c.bf16 %v725, %v724
      %v784 = vpack.c.bf16 %v727, %v726
      %v785 = vpack.c.bf16 %v729, %v728
      %vm786 = vcmask 359424
      %787 = vst.msk [vmem:[#allocation2] sm:$0xff] %vm786, %v778
      %788 = vst.msk [vmem:[#allocation2 + $0x8] sm:$0xff] %vm786, %v779
      %789 = vst.msk [vmem:[#allocation2 + $0x10] sm:$0xff] %vm786, %v780
      %790 = vst.msk [vmem:[#allocation2 + $0x18] sm:$0xff] %vm786, %v781
      %791 = vst.msk [vmem:[#allocation2 + $0x20] sm:$0xff] %vm786, %v782
      %792 = vst.msk [vmem:[#allocation2 + $0x28] sm:$0xff] %vm786, %v783
      %793 = vst.msk [vmem:[#allocation2 + $0x30] sm:$0xff] %vm786, %v784
      %794 = vst.msk [vmem:[#allocation2 + $0x38] sm:$0xff] %vm786, %v785
      %v795 = vpack.c.bf16 %v763, %v762
      %v796 = vpack.c.bf16 %v765, %v764
      %v797 = vpack.c.bf16 %v767, %v766
      %v798 = vpack.c.bf16 %v769, %v768
      %v799 = vpack.c.bf16 %v771, %v770
      %v800 = vpack.c.bf16 %v773, %v772
      %v801 = vpack.c.bf16 %v775, %v774
      %v802 = vpack.c.bf16 %v777, %v776
      %811 = vrot.lane.b32.xlu0 %v795, 44
      %v812 = vpop.permute.xlu0 %811
      %813 = vrot.lane.b32.xlu0 %v796, 44
      %v814 = vpop.permute.xlu0 %813
      %815 = vrot.lane.b32.xlu0 %v797, 44
      %v816 = vpop.permute.xlu0 %815
      %817 = vrot.lane.b32.xlu0 %v798, 44
      %v818 = vpop.permute.xlu0 %817
      %819 = vrot.lane.b32.xlu0 %v799, 44
      %v820 = vpop.permute.xlu0 %819
      %821 = vrot.lane.b32.xlu0 %v800, 44
      %v822 = vpop.permute.xlu0 %821
      %823 = vrot.lane.b32.xlu0 %v801, 44
      %v824 = vpop.permute.xlu0 %823
      %825 = vrot.lane.b32.xlu0 %v802, 44
      %v826 = vpop.permute.xlu0 %825
      %vm835 = vcmask 392544
      %836 = vst.msk [vmem:[#allocation2] sm:$0xff] %vm835, %v812
      %837 = vst.msk [vmem:[#allocation2 + $0x8] sm:$0xff] %vm835, %v814
      %838 = vst.msk [vmem:[#allocation2 + $0x10] sm:$0xff] %vm835, %v816
      %839 = vst.msk [vmem:[#allocation2 + $0x18] sm:$0xff] %vm835, %v818
      %840 = vst.msk [vmem:[#allocation2 + $0x20] sm:$0xff] %vm835, %v820
      %841 = vst.msk [vmem:[#allocation2 + $0x28] sm:$0xff] %vm835, %v822
      %842 = vst.msk [vmem:[#allocation2 + $0x30] sm:$0xff] %vm835, %v824
      %843 = vst.msk [vmem:[#allocation2 + $0x38] sm:$0xff] %vm835, %v826
      %v844 = vld [vmem:[#allocation2] sm:$0xff]
      %v845 = vld [vmem:[#allocation2 + $0x8] sm:$0xff]
      %v846 = vld [vmem:[#allocation2 + $0x10] sm:$0xff]
      %v847 = vld [vmem:[#allocation2 + $0x18] sm:$0xff]
      %v848 = vld [vmem:[#allocation2 + $0x20] sm:$0xff]
      %v849 = vld [vmem:[#allocation2 + $0x28] sm:$0xff]
      %v850 = vld [vmem:[#allocation2 + $0x30] sm:$0xff]
      %v851 = vld [vmem:[#allocation2 + $0x38] sm:$0xff]
      %v852 = vld [vmem:[%s6] sm:$0xf]
      %v853 = vld [vmem:[%s6 + $0x4] sm:$0xf]
      %v854 = vld [vmem:[%s6 + $0x8] sm:$0xf]
      %v855 = vld [vmem:[%s6 + $0xc] sm:$0xf]
      %v856 = vld [vmem:[%s6 + $0x10] sm:$0xf]
      %v857 = vld [vmem:[%s6 + $0x14] sm:$0xf]
      %v864 = vunpack.c.l.b16 %v852
      %v865 = vunpack.c.l.b16 %v853
      %v866 = vunpack.c.l.b16 %v854
      %v867 = vunpack.c.l.b16 %v855
      %v868 = vunpack.c.l.b16 %v856
      %v869 = vunpack.c.l.b16 %v857
      %v870 = vpack.c.b16 %v865, %v864
      %v871 = vpack.c.b16 %v867, %v866
      %v872 = vpack.c.b16 %v869, %v868
      %vm876 = vcmask 392192
      %v878 = vsel %vm876, %v844, 0
      %v881 = vsel %vm876, %v845, 0
      %v884 = vsel %vm876, %v846, 0
      %v887 = vsel %vm876, %v847, 0
      %v890 = vsel %vm876, %v848, 0
      %v893 = vsel %vm876, %v849, 0
      %v896 = vsel %vm876, %v850, 0
      %v899 = vsel %vm876, %v851, 0
      %901 = vmatprep.subr.bf16.mxu0 0
      %902 = vmatpush1.bf16.msra.mxu0 %v870
      %903 = vmatprep.subr.bf16.mxu0 0
      %904 = vmatpush1.bf16.msra.mxu0 %v871
      %905 = vmatprep.subr.bf16.mxu0 0
      %906 = vmatpush1.bf16.msra.mxu0 %v872
      %907 = vmatprep.subr.bf16.mxu0 0
      %908 = vmatpush1.bf16.msra.mxu0 0
      %909 = vmatprep.subr.bf16.mxu0 0
      %910 = vmatpush1.bf16.msra.mxu0 0
      %911 = vmatprep.subr.bf16.mxu0 0
      %912 = vmatpush1.bf16.msra.mxu0 0
      %913 = vmatprep.subr.bf16.mxu0 0
      %914 = vmatpush1.bf16.msra.mxu0 0
      %915 = vmatprep.subr.bf16.mxu0 0
      %916 = vmatpush1.bf16.msra.mxu0 0
      %917 = vmatprep.subr.bf16.mxu0 0
      %918 = vmatpush1.bf16.msra.mxu0 0
      %919 = vmatprep.subr.bf16.mxu0 0
      %920 = vmatpush1.bf16.msra.mxu0 0
      %921 = vmatprep.subr.bf16.mxu0 0
      %922 = vmatpush1.bf16.msra.mxu0 0
      %923 = vmatprep.subr.bf16.mxu0 0
      %924 = vmatpush1.bf16.msra.mxu0 0
      %925 = vmatprep.subr.bf16.mxu0 0
      %926 = vmatpush1.bf16.msra.mxu0 0
      %927 = vmatprep.subr.bf16.mxu0 0
      %928 = vmatpush1.bf16.msra.mxu0 0
      %929 = vmatprep.subr.bf16.mxu0 0
      %930 = vmatpush1.bf16.msra.mxu0 0
      %931 = vmatprep.subr.bf16.mxu0 0
      %932 = vmatpush1.bf16.msra.mxu0 0
      %933 = vmatprep.mubr.bf16.mxu0 0
      %934 = vmatmul.mubr.bf16.gmra.mrb[0].mxu0 %v878
      %v935 = vpop.f32.mrb[0].mxu0
      %v936 = vadd.f32 0.0, %v935
      %v937 = vpop.f32.mrb[0].mxu0
      %v938 = vpop.f32.mrb[0].mxu0
      %v939 = vadd.f32 0.0, %v938
      %v940 = vpop.f32.mrb[0].mxu0
      %941 = vmatprep.mubr.bf16.mxu0 0
      %942 = vmatmul.mubr.bf16.gmra.mrb[0].mxu0 %v881
      %v943 = vpop.f32.mrb[0].mxu0
      %v944 = vadd.f32 0.0, %v943
      %v945 = vpop.f32.mrb[0].mxu0
      %v946 = vpop.f32.mrb[0].mxu0
      %v947 = vadd.f32 0.0, %v946
      %v948 = vpop.f32.mrb[0].mxu0
      %949 = vmatprep.mubr.bf16.mxu0 0
      %950 = vmatmul.mubr.bf16.gmra.mrb[0].mxu0 %v884
      %v951 = vpop.f32.mrb[0].mxu0
      %v952 = vadd.f32 0.0, %v951
      %v953 = vpop.f32.mrb[0].mxu0
      %v954 = vpop.f32.mrb[0].mxu0
      %v955 = vadd.f32 0.0, %v954
      %v956 = vpop.f32.mrb[0].mxu0
      %957 = vmatprep.mubr.bf16.mxu0 0
      %958 = vmatmul.mubr.bf16.gmra.mrb[0].mxu0 %v887
      %v959 = vpop.f32.mrb[0].mxu0
      %v960 = vadd.f32 0.0, %v959
      %v961 = vpop.f32.mrb[0].mxu0
      %v962 = vpop.f32.mrb[0].mxu0
      %v963 = vadd.f32 0.0, %v962
      %v964 = vpop.f32.mrb[0].mxu0
      %965 = vmatprep.mubr.bf16.mxu0 0
      %966 = vmatmul.mubr.bf16.gmra.mrb[0].mxu0 %v890
      %v967 = vpop.f32.mrb[0].mxu0
      %v968 = vadd.f32 0.0, %v967
      %v969 = vpop.f32.mrb[0].mxu0
      %v970 = vpop.f32.mrb[0].mxu0
      %v971 = vadd.f32 0.0, %v970
      %v972 = vpop.f32.mrb[0].mxu0
      %973 = vmatprep.mubr.bf16.mxu0 0
      %974 = vmatmul.mubr.bf16.gmra.mrb[0].mxu0 %v893
      %v975 = vpop.f32.mrb[0].mxu0
      %v976 = vadd.f32 0.0, %v975
      %v977 = vpop.f32.mrb[0].mxu0
      %v978 = vpop.f32.mrb[0].mxu0
      %v979 = vadd.f32 0.0, %v978
      %v980 = vpop.f32.mrb[0].mxu0
      %981 = vmatprep.mubr.bf16.mxu0 0
      %982 = vmatmul.mubr.bf16.gmra.mrb[0].mxu0 %v896
      %v983 = vpop.f32.mrb[0].mxu0
      %v984 = vadd.f32 0.0, %v983
      %v985 = vpop.f32.mrb[0].mxu0
      %v986 = vpop.f32.mrb[0].mxu0
      %v987 = vadd.f32 0.0, %v986
      %v988 = vpop.f32.mrb[0].mxu0
      %989 = vmatprep.mubr.bf16.mxu0 0
      %990 = vmatmul.mubr.bf16.gmra.mrb[0].mxu0 %v899
      %v991 = vpop.f32.mrb[0].mxu0
      %v992 = vadd.f32 0.0, %v991
      %v993 = vpop.f32.mrb[0].mxu0
      %v994 = vpop.f32.mrb[0].mxu0
      %v995 = vadd.f32 0.0, %v994
      %v996 = vpop.f32.mrb[0].mxu0
      %997 = vdwg.mxu0
      %v998 = vld [vmem:[%s1] sm:$0xf]
      %v999 = vld [vmem:[%s1 + $0x4] sm:$0xf]
      %v1000 = vld [vmem:[%s1 + $0x8] sm:$0xf]
      %v1001 = vld [vmem:[%s1 + $0xc] sm:$0xf]
      %v1002 = vld [vmem:[%s1 + $0x10] sm:$0xf]
      %v1003 = vld [vmem:[%s1 + $0x14] sm:$0xf]
      %v1004 = vld [vmem:[%s1 + $0x18] sm:$0xf]
      %v1005 = vld [vmem:[%s1 + $0x1c] sm:$0xf]
      %v1006 = vld [vmem:[%s1 + $0x20] sm:$0xf]
      %v1007 = vld [vmem:[%s1 + $0x24] sm:$0xf]
      %v1008 = vld [vmem:[%s1 + $0x28] sm:$0xf]
      %v1009 = vld [vmem:[%s1 + $0x2c] sm:$0xf]
      %v1010 = vld [vmem:[%s1 + $0x30] sm:$0xf]
      %v1011 = vld [vmem:[%s1 + $0x34] sm:$0xf]
      %v1012 = vld [vmem:[%s1 + $0x38] sm:$0xf]
      %v1013 = vld [vmem:[%s1 + $0x3c] sm:$0xf]
      %v1014 = vpack.c.bf16 %v939, %v936
      %v1015 = vpack.c.bf16 %v947, %v944
      %v1016 = vpack.c.bf16 %v955, %v952
      %v1017 = vpack.c.bf16 %v963, %v960
      %v1018 = vpack.c.bf16 %v971, %v968
      %v1019 = vpack.c.bf16 %v979, %v976
      %v1020 = vpack.c.bf16 %v987, %v984
      %v1021 = vpack.c.bf16 %v995, %v992
      %v1038 = vunpack.c.l.b16 %v998
      %v1039 = vunpack.c.l.b16 %v999
      %v1040 = vunpack.c.l.b16 %v1000
      %v1041 = vunpack.c.l.b16 %v1001
      %v1042 = vunpack.c.l.b16 %v1002
      %v1043 = vunpack.c.l.b16 %v1003
      %v1044 = vunpack.c.l.b16 %v1004
      %v1045 = vunpack.c.l.b16 %v1005
      %v1046 = vunpack.c.l.b16 %v1006
      %v1047 = vunpack.c.l.b16 %v1007
      %v1048 = vunpack.c.l.b16 %v1008
      %v1049 = vunpack.c.l.b16 %v1009
      %v1050 = vunpack.c.l.b16 %v1010
      %v1051 = vunpack.c.l.b16 %v1011
      %v1052 = vunpack.c.l.b16 %v1012
      %v1053 = vunpack.c.l.b16 %v1013
      %v1054 = vpack.c.b16 %v1039, %v1038
      %v1055 = vpack.c.b16 %v1041, %v1040
      %v1056 = vpack.c.b16 %v1043, %v1042
      %v1057 = vpack.c.b16 %v1045, %v1044
      %v1058 = vpack.c.b16 %v1047, %v1046
      %v1059 = vpack.c.b16 %v1049, %v1048
      %v1060 = vpack.c.b16 %v1051, %v1050
      %v1061 = vpack.c.b16 %v1053, %v1052
      %1070 = vmatprep.subr.bf16.mxu0 0
      %1071 = vmatpush1.bf16.msra.mxu0 %v1014
      %1072 = vmatprep.subr.bf16.mxu0 0
      %1073 = vmatpush1.bf16.msra.mxu0 %v1015
      %1074 = vmatprep.subr.bf16.mxu0 0
      %1075 = vmatpush1.bf16.msra.mxu0 %v1016
      %1076 = vmatprep.subr.bf16.mxu0 0
      %1077 = vmatpush1.bf16.msra.mxu0 %v1017
      %1078 = vmatprep.subr.bf16.mxu0 0
      %1079 = vmatpush1.bf16.msra.mxu0 %v1018
      %1080 = vmatprep.subr.bf16.mxu0 0
      %1081 = vmatpush1.bf16.msra.mxu0 %v1019
      %1082 = vmatprep.subr.bf16.mxu0 0
      %1083 = vmatpush1.bf16.msra.mxu0 %v1020
      %1084 = vmatprep.subr.bf16.mxu0 0
      %1085 = vmatpush1.bf16.msra.mxu0 %v1021
      %1086 = vmatprep.subr.bf16.mxu0 0
      %1087 = vmatpush1.bf16.msra.mxu0 0
      %1088 = vmatprep.subr.bf16.mxu0 0
      %1089 = vmatpush1.bf16.msra.mxu0 0
      %1090 = vmatprep.subr.bf16.mxu0 0
      %1091 = vmatpush1.bf16.msra.mxu0 0
      %1092 = vmatprep.subr.bf16.mxu0 0
      %1093 = vmatpush1.bf16.msra.mxu0 0
      %1094 = vmatprep.subr.bf16.mxu0 0
      %1095 = vmatpush1.bf16.msra.mxu0 0
      %1096 = vmatprep.subr.bf16.mxu0 0
      %1097 = vmatpush1.bf16.msra.mxu0 0
      %1098 = vmatprep.subr.bf16.mxu0 0
      %1099 = vmatpush1.bf16.msra.mxu0 0
      %1100 = vmatprep.subr.bf16.mxu0 0
      %1101 = vmatpush1.bf16.msra.mxu0 0
      %1102 = vmatprep.mubr.bf16.mxu0 0
      %1103 = vmatmul.mubr.bf16.gmra.mrb[0].mxu0 %v1054
      %v1104 = vpop.f32.mrb[0].mxu0
      %v1105 = vadd.f32 0.0, %v1104
      %v1106 = vpop.f32.mrb[0].mxu0
      %v1107 = vpop.f32.mrb[0].mxu0
      %v1108 = vadd.f32 0.0, %v1107
      %v1109 = vpop.f32.mrb[0].mxu0
      %1110 = vmatprep.mubr.bf16.mxu0 0
      %1111 = vmatmul.mubr.bf16.gmra.mrb[0].mxu0 %v1055
      %v1112 = vpop.f32.mrb[0].mxu0
      %v1113 = vadd.f32 0.0, %v1112
      %v1114 = vpop.f32.mrb[0].mxu0
      %v1115 = vpop.f32.mrb[0].mxu0
      %v1116 = vadd.f32 0.0, %v1115
      %v1117 = vpop.f32.mrb[0].mxu0
      %1118 = vmatprep.mubr.bf16.mxu0 0
      %1119 = vmatmul.mubr.bf16.gmra.mrb[0].mxu0 %v1056
      %v1120 = vpop.f32.mrb[0].mxu0
      %v1121 = vadd.f32 0.0, %v1120
      %v1122 = vpop.f32.mrb[0].mxu0
      %v1123 = vpop.f32.mrb[0].mxu0
      %v1124 = vadd.f32 0.0, %v1123
      %v1125 = vpop.f32.mrb[0].mxu0
      %1126 = vmatprep.mubr.bf16.mxu0 0
      %1127 = vmatmul.mubr.bf16.gmra.mrb[0].mxu0 %v1057
      %v1128 = vpop.f32.mrb[0].mxu0
      %v1129 = vadd.f32 0.0, %v1128
      %v1130 = vpop.f32.mrb[0].mxu0
      %v1131 = vpop.f32.mrb[0].mxu0
      %v1132 = vadd.f32 0.0, %v1131
      %v1133 = vpop.f32.mrb[0].mxu0
      %1134 = vmatprep.mubr.bf16.mxu0 0
      %1135 = vmatmul.mubr.bf16.gmra.mrb[0].mxu0 %v1058
      %v1136 = vpop.f32.mrb[0].mxu0
      %v1137 = vadd.f32 0.0, %v1136
      %v1138 = vpop.f32.mrb[0].mxu0
      %v1139 = vpop.f32.mrb[0].mxu0
      %v1140 = vadd.f32 0.0, %v1139
      %v1141 = vpop.f32.mrb[0].mxu0
      %1142 = vmatprep.mubr.bf16.mxu0 0
      %1143 = vmatmul.mubr.bf16.gmra.mrb[0].mxu0 %v1059
      %v1144 = vpop.f32.mrb[0].mxu0
      %v1145 = vadd.f32 0.0, %v1144
      %v1146 = vpop.f32.mrb[0].mxu0
      %v1147 = vpop.f32.mrb[0].mxu0
      %v1148 = vadd.f32 0.0, %v1147
      %v1149 = vpop.f32.mrb[0].mxu0
      %1150 = vmatprep.mubr.bf16.mxu0 0
      %1151 = vmatmul.mubr.bf16.gmra.mrb[0].mxu0 %v1060
      %v1152 = vpop.f32.mrb[0].mxu0
      %v1153 = vadd.f32 0.0, %v1152
      %v1154 = vpop.f32.mrb[0].mxu0
      %v1155 = vpop.f32.mrb[0].mxu0
      %v1156 = vadd.f32 0.0, %v1155
      %v1157 = vpop.f32.mrb[0].mxu0
      %1158 = vmatprep.mubr.bf16.mxu0 0
      %1159 = vmatmul.mubr.bf16.gmra.mrb[0].mxu0 %v1061
      %v1160 = vpop.f32.mrb[0].mxu0
      %v1161 = vadd.f32 0.0, %v1160
      %v1162 = vpop.f32.mrb[0].mxu0
      %v1163 = vpop.f32.mrb[0].mxu0
      %v1164 = vadd.f32 0.0, %v1163
      %v1165 = vpop.f32.mrb[0].mxu0
      %1166 = vdwg.mxu0
      %v1167 = vmax.f32 %v1105, 0.0
      %v1168 = vmax.f32 %v1108, 0.0
      %v1169 = vmax.f32 %v1113, 0.0
      %v1170 = vmax.f32 %v1116, 0.0
      %v1171 = vmax.f32 %v1121, 0.0
      %v1172 = vmax.f32 %v1124, 0.0
      %v1173 = vmax.f32 %v1129, 0.0
      %v1174 = vmax.f32 %v1132, 0.0
      %v1175 = vmax.f32 %v1137, 0.0
      %v1176 = vmax.f32 %v1140, 0.0
      %v1177 = vmax.f32 %v1145, 0.0
      %v1178 = vmax.f32 %v1148, 0.0
      %v1179 = vmax.f32 %v1153, 0.0
      %v1180 = vmax.f32 %v1156, 0.0
      %v1181 = vmax.f32 %v1161, 0.0
      %v1182 = vmax.f32 %v1164, 0.0
      %v1183 = vpack.c.bf16 %v1168, %v1167
      %v1184 = vpack.c.bf16 %v1170, %v1169
      %v1185 = vpack.c.bf16 %v1172, %v1171
      %v1186 = vpack.c.bf16 %v1174, %v1173
      %v1187 = vpack.c.bf16 %v1176, %v1175
      %v1188 = vpack.c.bf16 %v1178, %v1177
      %v1189 = vpack.c.bf16 %v1180, %v1179
      %v1190 = vpack.c.bf16 %v1182, %v1181
      %v1191 = vld [vmem:[%s7] sm:$0xf]
      %v1192 = vld [vmem:[%s7 + $0x4] sm:$0xf]
      %v1193 = vld [vmem:[%s7 + $0x8] sm:$0xf]
      %v1194 = vld [vmem:[%s7 + $0xc] sm:$0xf]
      %v1195 = vld [vmem:[%s7 + $0x10] sm:$0xf]
      %v1196 = vld [vmem:[%s7 + $0x14] sm:$0xf]
      %v1197 = vld [vmem:[%s8] sm:$0x1]
      %v1199 = vlaneseq
      %v1200 = vshrl.u32 %v1199, 7
      %v1201 = vsub.s32 0, %v1200
      %v1202 = vrot.slane %v1197, %v1201
      %v1210 = vunpack.c.l.b16 %v1191
      %v1211 = vunpack.c.l.b16 %v1192
      %v1212 = vunpack.c.l.b16 %v1193
      %v1213 = vunpack.c.l.b16 %v1194
      %v1214 = vunpack.c.l.b16 %v1195
      %v1215 = vunpack.c.l.b16 %v1196
      %v1216 = vpack.c.b16 %v1211, %v1210
      %v1217 = vpack.c.b16 %v1213, %v1212
      %v1218 = vpack.c.b16 %v1215, %v1214
      %v1223 = vsel %vm876, %v1183, 0
      %v1226 = vsel %vm876, %v1184, 0
      %v1229 = vsel %vm876, %v1185, 0
      %v1232 = vsel %vm876, %v1186, 0
      %v1235 = vsel %vm876, %v1187, 0
      %v1238 = vsel %vm876, %v1188, 0
      %v1241 = vsel %vm876, %v1189, 0
      %v1244 = vsel %vm876, %v1190, 0
      %1246 = vmatprep.subr.bf16.mxu0 0
      %1247 = vmatpush1.bf16.msra.mxu0 %v1216
      %1248 = vmatprep.subr.bf16.mxu0 0
      %1249 = vmatpush1.bf16.msra.mxu0 %v1217
      %1250 = vmatprep.subr.bf16.mxu0 0
      %1251 = vmatpush1.bf16.msra.mxu0 %v1218
      %1252 = vmatprep.subr.bf16.mxu0 0
      %1253 = vmatpush1.bf16.msra.mxu0 0
      %1254 = vmatprep.subr.bf16.mxu0 0
      %1255 = vmatpush1.bf16.msra.mxu0 0
      %1256 = vmatprep.subr.bf16.mxu0 0
      %1257 = vmatpush1.bf16.msra.mxu0 0
      %1258 = vmatprep.subr.bf16.mxu0 0
      %1259 = vmatpush1.bf16.msra.mxu0 0
      %1260 = vmatprep.subr.bf16.mxu0 0
      %1261 = vmatpush1.bf16.msra.mxu0 0
      %1262 = vmatprep.subr.bf16.mxu0 0
      %1263 = vmatpush1.bf16.msra.mxu0 0
      %1264 = vmatprep.subr.bf16.mxu0 0
      %1265 = vmatpush1.bf16.msra.mxu0 0
      %1266 = vmatprep.subr.bf16.mxu0 0
      %1267 = vmatpush1.bf16.msra.mxu0 0
      %1268 = vmatprep.subr.bf16.mxu0 0
      %1269 = vmatpush1.bf16.msra.mxu0 0
      %1270 = vmatprep.subr.bf16.mxu0 0
      %1271 = vmatpush1.bf16.msra.mxu0 0
      %1272 = vmatprep.subr.bf16.mxu0 0
      %1273 = vmatpush1.bf16.msra.mxu0 0
      %1274 = vmatprep.subr.bf16.mxu0 0
      %1275 = vmatpush1.bf16.msra.mxu0 0
      %1276 = vmatprep.subr.bf16.mxu0 0
      %1277 = vmatpush1.bf16.msra.mxu0 0
      %1278 = vmatprep.mubr.bf16.mxu0 0
      %1279 = vmatmul.mubr.bf16.gmra.mrb[0].mxu0 %v1223
      %v1280 = vpop.f32.mrb[0].mxu0
      %v1281 = vadd.f32 %v1202, %v1280
      %v1282 = vpop.f32.mrb[0].mxu0
      %v1283 = vpop.f32.mrb[0].mxu0
      %v1284 = vadd.f32 %v1202, %v1283
      %v1285 = vpop.f32.mrb[0].mxu0
      %1286 = vmatprep.mubr.bf16.mxu0 0
      %1287 = vmatmul.mubr.bf16.gmra.mrb[0].mxu0 %v1226
      %v1288 = vpop.f32.mrb[0].mxu0
      %v1289 = vadd.f32 %v1202, %v1288
      %v1290 = vpop.f32.mrb[0].mxu0
      %v1291 = vpop.f32.mrb[0].mxu0
      %v1292 = vadd.f32 %v1202, %v1291
      %v1293 = vpop.f32.mrb[0].mxu0
      %1294 = vmatprep.mubr.bf16.mxu0 0
      %1295 = vmatmul.mubr.bf16.gmra.mrb[0].mxu0 %v1229
      %v1296 = vpop.f32.mrb[0].mxu0
      %v1297 = vadd.f32 %v1202, %v1296
      %v1298 = vpop.f32.mrb[0].mxu0
      %v1299 = vpop.f32.mrb[0].mxu0
      %v1300 = vadd.f32 %v1202, %v1299
      %v1301 = vpop.f32.mrb[0].mxu0
      %1302 = vmatprep.mubr.bf16.mxu0 0
      %1303 = vmatmul.mubr.bf16.gmra.mrb[0].mxu0 %v1232
      %v1304 = vpop.f32.mrb[0].mxu0
      %v1305 = vadd.f32 %v1202, %v1304
      %v1306 = vpop.f32.mrb[0].mxu0
      %v1307 = vpop.f32.mrb[0].mxu0
      %v1308 = vadd.f32 %v1202, %v1307
      %v1309 = vpop.f32.mrb[0].mxu0
      %1310 = vmatprep.mubr.bf16.mxu0 0
      %1311 = vmatmul.mubr.bf16.gmra.mrb[0].mxu0 %v1235
      %v1312 = vpop.f32.mrb[0].mxu0
      %v1313 = vadd.f32 %v1202, %v1312
      %v1314 = vpop.f32.mrb[0].mxu0
      %v1315 = vpop.f32.mrb[0].mxu0
      %v1316 = vadd.f32 %v1202, %v1315
      %v1317 = vpop.f32.mrb[0].mxu0
      %1318 = vmatprep.mubr.bf16.mxu0 0
      %1319 = vmatmul.mubr.bf16.gmra.mrb[0].mxu0 %v1238
      %v1320 = vpop.f32.mrb[0].mxu0
      %v1321 = vadd.f32 %v1202, %v1320
      %v1322 = vpop.f32.mrb[0].mxu0
      %v1323 = vpop.f32.mrb[0].mxu0
      %v1324 = vadd.f32 %v1202, %v1323
      %v1325 = vpop.f32.mrb[0].mxu0
      %1326 = vmatprep.mubr.bf16.mxu0 0
      %1327 = vmatmul.mubr.bf16.gmra.mrb[0].mxu0 %v1241
      %v1328 = vpop.f32.mrb[0].mxu0
      %v1329 = vadd.f32 %v1202, %v1328
      %v1330 = vpop.f32.mrb[0].mxu0
      %v1331 = vpop.f32.mrb[0].mxu0
      %v1332 = vadd.f32 %v1202, %v1331
      %v1333 = vpop.f32.mrb[0].mxu0
      %1334 = vmatprep.mubr.bf16.mxu0 0
      %1335 = vmatmul.mubr.bf16.gmra.mrb[0].mxu0 %v1244
      %v1336 = vpop.f32.mrb[0].mxu0
      %v1337 = vadd.f32 %v1202, %v1336
      %v1338 = vpop.f32.mrb[0].mxu0
      %v1339 = vpop.f32.mrb[0].mxu0
      %v1340 = vadd.f32 %v1202, %v1339
      %v1341 = vpop.f32.mrb[0].mxu0
      %1342 = vdwg.mxu0
      %v1343 = vxor.u32 %v1281, 2147483648
      %v1344 = vxor.u32 %v1284, 2147483648
      %v1345 = vxor.u32 %v1289, 2147483648
      %v1346 = vxor.u32 %v1292, 2147483648
      %v1347 = vxor.u32 %v1297, 2147483648
      %v1348 = vxor.u32 %v1300, 2147483648
      %v1349 = vxor.u32 %v1305, 2147483648
      %v1350 = vxor.u32 %v1308, 2147483648
      %v1351 = vxor.u32 %v1313, 2147483648
      %v1352 = vxor.u32 %v1316, 2147483648
      %v1353 = vxor.u32 %v1321, 2147483648
      %v1354 = vxor.u32 %v1324, 2147483648
      %v1355 = vxor.u32 %v1329, 2147483648
      %v1356 = vxor.u32 %v1332, 2147483648
      %v1357 = vxor.u32 %v1337, 2147483648
      %v1358 = vxor.u32 %v1340, 2147483648
      %v1359 = vmul.f32 %v1343, 1.442695
      %v1360 = vpow.pop %v1359
      %v1361 = vmul.f32 %v1344, 1.442695
      %v1362 = vpow.pop %v1361
      %v1363 = vmul.f32 %v1345, 1.442695
      %v1364 = vpow.pop %v1363
      %v1365 = vmul.f32 %v1346, 1.442695
      %v1366 = vpow.pop %v1365
      %v1367 = vmul.f32 %v1347, 1.442695
      %v1368 = vpow.pop %v1367
      %v1369 = vmul.f32 %v1348, 1.442695
      %v1370 = vpow.pop %v1369
      %v1371 = vmul.f32 %v1349, 1.442695
      %v1372 = vpow.pop %v1371
      %v1373 = vmul.f32 %v1350, 1.442695
      %v1374 = vpow.pop %v1373
      %v1375 = vmul.f32 %v1351, 1.442695
      %v1376 = vpow.pop %v1375
      %v1377 = vmul.f32 %v1352, 1.442695
      %v1378 = vpow.pop %v1377
      %v1379 = vmul.f32 %v1353, 1.442695
      %v1380 = vpow.pop %v1379
      %v1381 = vmul.f32 %v1354, 1.442695
      %v1382 = vpow.pop %v1381
      %v1383 = vmul.f32 %v1355, 1.442695
      %v1384 = vpow.pop %v1383
      %v1385 = vmul.f32 %v1356, 1.442695
      %v1386 = vpow.pop %v1385
      %v1387 = vmul.f32 %v1357, 1.442695
      %v1388 = vpow.pop %v1387
      %v1389 = vmul.f32 %v1358, 1.442695
      %v1390 = vpow.pop %v1389
      %v1391 = vadd.f32 %v1360, 1.0
      %v1392 = vadd.f32 %v1362, 1.0
      %v1393 = vadd.f32 %v1364, 1.0
      %v1394 = vadd.f32 %v1366, 1.0
      %v1395 = vadd.f32 %v1368, 1.0
      %v1396 = vadd.f32 %v1370, 1.0
      %v1397 = vadd.f32 %v1372, 1.0
      %v1398 = vadd.f32 %v1374, 1.0
      %v1399 = vadd.f32 %v1376, 1.0
      %v1400 = vadd.f32 %v1378, 1.0
      %v1401 = vadd.f32 %v1380, 1.0
      %v1402 = vadd.f32 %v1382, 1.0
      %v1403 = vadd.f32 %v1384, 1.0
      %v1404 = vadd.f32 %v1386, 1.0
      %v1405 = vadd.f32 %v1388, 1.0
      %v1406 = vadd.f32 %v1390, 1.0
      %v1407 = vrcp.pop %v1391
      %v1408 = vmul.f32 1.0, %v1407
      %v1409 = vrcp.pop %v1392
      %v1410 = vmul.f32 1.0, %v1409
      %v1411 = vrcp.pop %v1393
      %v1412 = vmul.f32 1.0, %v1411
      %v1413 = vrcp.pop %v1394
      %v1414 = vmul.f32 1.0, %v1413
      %v1415 = vrcp.pop %v1395
      %v1416 = vmul.f32 1.0, %v1415
      %v1417 = vrcp.pop %v1396
      %v1418 = vmul.f32 1.0, %v1417
      %v1419 = vrcp.pop %v1397
      %v1420 = vmul.f32 1.0, %v1419
      %v1421 = vrcp.pop %v1398
      %v1422 = vmul.f32 1.0, %v1421
      %v1423 = vrcp.pop %v1399
      %v1424 = vmul.f32 1.0, %v1423
      %v1425 = vrcp.pop %v1400
      %v1426 = vmul.f32 1.0, %v1425
      %v1427 = vrcp.pop %v1401
      %v1428 = vmul.f32 1.0, %v1427
      %v1429 = vrcp.pop %v1402
      %v1430 = vmul.f32 1.0, %v1429
      %v1431 = vrcp.pop %v1403
      %v1432 = vmul.f32 1.0, %v1431
      %v1433 = vrcp.pop %v1404
      %v1434 = vmul.f32 1.0, %v1433
      %v1435 = vrcp.pop %v1405
      %v1436 = vmul.f32 1.0, %v1435
      %v1437 = vrcp.pop %v1406
      %v1438 = vmul.f32 1.0, %v1437
      %1455 = vrot.lane.b32.xlu0 %v1408, 100
      %v1456 = vpop.permute.xlu0 %1455
      %1457 = vrot.lane.b32.xlu0 %v1410, 100
      %v1458 = vpop.permute.xlu0 %1457
      %1459 = vrot.lane.b32.xlu0 %v1412, 100
      %v1460 = vpop.permute.xlu0 %1459
      %1461 = vrot.lane.b32.xlu0 %v1414, 100
      %v1462 = vpop.permute.xlu0 %1461
      %1463 = vrot.lane.b32.xlu0 %v1416, 100
      %v1464 = vpop.permute.xlu0 %1463
      %1465 = vrot.lane.b32.xlu0 %v1418, 100
      %v1466 = vpop.permute.xlu0 %1465
      %1467 = vrot.lane.b32.xlu0 %v1420, 100
      %v1468 = vpop.permute.xlu0 %1467
      %1469 = vrot.lane.b32.xlu0 %v1422, 100
      %v1470 = vpop.permute.xlu0 %1469
      %1471 = vrot.lane.b32.xlu0 %v1424, 100
      %v1472 = vpop.permute.xlu0 %1471
      %1473 = vrot.lane.b32.xlu0 %v1426, 100
      %v1474 = vpop.permute.xlu0 %1473
      %1475 = vrot.lane.b32.xlu0 %v1428, 100
      %v1476 = vpop.permute.xlu0 %1475
      %1477 = vrot.lane.b32.xlu0 %v1430, 100
      %v1478 = vpop.permute.xlu0 %1477
      %1479 = vrot.lane.b32.xlu0 %v1432, 100
      %v1480 = vpop.permute.xlu0 %1479
      %1481 = vrot.lane.b32.xlu0 %v1434, 100
      %v1482 = vpop.permute.xlu0 %1481
      %1483 = vrot.lane.b32.xlu0 %v1436, 100
      %v1484 = vpop.permute.xlu0 %1483
      %1485 = vrot.lane.b32.xlu0 %v1438, 100
      %v1486 = vpop.permute.xlu0 %1485
      %v1503 = vmul.f32 %v1281, %v1456
      %v1504 = vmul.f32 %v1284, %v1458
      %v1505 = vmul.f32 %v1289, %v1460
      %v1506 = vmul.f32 %v1292, %v1462
      %v1507 = vmul.f32 %v1297, %v1464
      %v1508 = vmul.f32 %v1300, %v1466
      %v1509 = vmul.f32 %v1305, %v1468
      %v1510 = vmul.f32 %v1308, %v1470
      %v1511 = vmul.f32 %v1313, %v1472
      %v1512 = vmul.f32 %v1316, %v1474
      %v1513 = vmul.f32 %v1321, %v1476
      %v1514 = vmul.f32 %v1324, %v1478
      %v1515 = vmul.f32 %v1329, %v1480
      %v1516 = vmul.f32 %v1332, %v1482
      %v1517 = vmul.f32 %v1337, %v1484
      %v1518 = vmul.f32 %v1340, %v1486
      %v1519 = vld [vmem:[%s3] sm:$0xff]
      %v1520 = vld [vmem:[%s3 + $0x8] sm:$0xff]
      %v1521 = vld [vmem:[%s3 + $0x10] sm:$0xff]
      %v1522 = vld [vmem:[%s3 + $0x18] sm:$0xff]
      %v1523 = vld [vmem:[%s3 + $0x20] sm:$0xff]
      %v1524 = vld [vmem:[%s3 + $0x28] sm:$0xff]
      %v1525 = vld [vmem:[%s3 + $0x30] sm:$0xff]
      %v1526 = vld [vmem:[%s3 + $0x38] sm:$0xff]
      %v1527 = vld [vmem:[%s3 + $0x40] sm:$0xff]
      %v1528 = vld [vmem:[%s3 + $0x48] sm:$0xff]
      %v1529 = vld [vmem:[%s3 + $0x50] sm:$0xff]
      %v1530 = vld [vmem:[%s3 + $0x58] sm:$0xff]
      %v1531 = vld [vmem:[%s3 + $0x60] sm:$0xff]
      %v1532 = vld [vmem:[%s3 + $0x68] sm:$0xff]
      %v1533 = vld [vmem:[%s3 + $0x70] sm:$0xff]
      %v1534 = vld [vmem:[%s3 + $0x78] sm:$0xff]
      %v1535 = vmul.f32 %v1519, %v1167
      %v1536 = vmul.f32 %v1520, %v1168
      %v1537 = vmul.f32 %v1521, %v1169
      %v1538 = vmul.f32 %v1522, %v1170
      %v1539 = vmul.f32 %v1523, %v1171
      %v1540 = vmul.f32 %v1524, %v1172
      %v1541 = vmul.f32 %v1525, %v1173
      %v1542 = vmul.f32 %v1526, %v1174
      %v1543 = vmul.f32 %v1527, %v1175
      %v1544 = vmul.f32 %v1528, %v1176
      %v1545 = vmul.f32 %v1529, %v1177
      %v1546 = vmul.f32 %v1530, %v1178
      %v1547 = vmul.f32 %v1531, %v1179
      %v1548 = vmul.f32 %v1532, %v1180
      %v1549 = vmul.f32 %v1533, %v1181
      %v1550 = vmul.f32 %v1534, %v1182
      %vm1551 = vcmask 228352
      %1552 = vst.msk [vmem:[%s334] sm:$0xff] %vm1551, %v1503
      %1553 = vst.msk [vmem:[%s334 + $0x8] sm:$0xff] %vm1551, %v1504
      %1554 = vst.msk [vmem:[%s334 + $0x10] sm:$0xff] %vm1551, %v1505
      %1555 = vst.msk [vmem:[%s334 + $0x18] sm:$0xff] %vm1551, %v1506
      %1556 = vst.msk [vmem:[%s334 + $0x20] sm:$0xff] %vm1551, %v1507
      %1557 = vst.msk [vmem:[%s334 + $0x28] sm:$0xff] %vm1551, %v1508
      %1558 = vst.msk [vmem:[%s334 + $0x30] sm:$0xff] %vm1551, %v1509
      %1559 = vst.msk [vmem:[%s334 + $0x38] sm:$0xff] %vm1551, %v1510
      %1560 = vst.msk [vmem:[%s334 + $0x40] sm:$0xff] %vm1551, %v1511
      %1561 = vst.msk [vmem:[%s334 + $0x48] sm:$0xff] %vm1551, %v1512
      %1562 = vst.msk [vmem:[%s334 + $0x50] sm:$0xff] %vm1551, %v1513
      %1563 = vst.msk [vmem:[%s334 + $0x58] sm:$0xff] %vm1551, %v1514
      %1564 = vst.msk [vmem:[%s334 + $0x60] sm:$0xff] %vm1551, %v1515
      %1565 = vst.msk [vmem:[%s334 + $0x68] sm:$0xff] %vm1551, %v1516
      %1566 = vst.msk [vmem:[%s334 + $0x70] sm:$0xff] %vm1551, %v1517
      %1567 = vst.msk [vmem:[%s334 + $0x78] sm:$0xff] %vm1551, %v1518
      %1584 = vrot.lane.b32.xlu0 %v1535, 28
      %v1585 = vpop.permute.xlu0 %1584
      %1586 = vrot.lane.b32.xlu0 %v1536, 28
      %v1587 = vpop.permute.xlu0 %1586
      %1588 = vrot.lane.b32.xlu0 %v1537, 28
      %v1589 = vpop.permute.xlu0 %1588
      %1590 = vrot.lane.b32.xlu0 %v1538, 28
      %v1591 = vpop.permute.xlu0 %1590
      %1592 = vrot.lane.b32.xlu0 %v1539, 28
      %v1593 = vpop.permute.xlu0 %1592
      %1594 = vrot.lane.b32.xlu0 %v1540, 28
      %v1595 = vpop.permute.xlu0 %1594
      %1596 = vrot.lane.b32.xlu0 %v1541, 28
      %v1597 = vpop.permute.xlu0 %1596
      %1598 = vrot.lane.b32.xlu0 %v1542, 28
      %v1599 = vpop.permute.xlu0 %1598
      %1600 = vrot.lane.b32.xlu0 %v1543, 28
      %v1601 = vpop.permute.xlu0 %1600
      %1602 = vrot.lane.b32.xlu0 %v1544, 28
      %v1603 = vpop.permute.xlu0 %1602
      %1604 = vrot.lane.b32.xlu0 %v1545, 28
      %v1605 = vpop.permute.xlu0 %1604
      %1606 = vrot.lane.b32.xlu0 %v1546, 28
      %v1607 = vpop.permute.xlu0 %1606
      %1608 = vrot.lane.b32.xlu0 %v1547, 28
      %v1609 = vpop.permute.xlu0 %1608
      %1610 = vrot.lane.b32.xlu0 %v1548, 28
      %v1611 = vpop.permute.xlu0 %1610
      %1612 = vrot.lane.b32.xlu0 %v1549, 28
      %v1613 = vpop.permute.xlu0 %1612
      %1614 = vrot.lane.b32.xlu0 %v1550, 28
      %v1615 = vpop.permute.xlu0 %1614
      %vm1632 = vcmask 261344
      %1633 = vst.msk [vmem:[%s334] sm:$0xff] %vm1632, %v1585
      %1634 = vst.msk [vmem:[%s334 + $0x8] sm:$0xff] %vm1632, %v1587
      %1635 = vst.msk [vmem:[%s334 + $0x10] sm:$0xff] %vm1632, %v1589
      %1636 = vst.msk [vmem:[%s334 + $0x18] sm:$0xff] %vm1632, %v1591
      %1637 = vst.msk [vmem:[%s334 + $0x20] sm:$0xff] %vm1632, %v1593
      %1638 = vst.msk [vmem:[%s334 + $0x28] sm:$0xff] %vm1632, %v1595
      %1639 = vst.msk [vmem:[%s334 + $0x30] sm:$0xff] %vm1632, %v1597
      %1640 = vst.msk [vmem:[%s334 + $0x38] sm:$0xff] %vm1632, %v1599
      %1641 = vst.msk [vmem:[%s334 + $0x40] sm:$0xff] %vm1632, %v1601
      %1642 = vst.msk [vmem:[%s334 + $0x48] sm:$0xff] %vm1632, %v1603
      %1643 = vst.msk [vmem:[%s334 + $0x50] sm:$0xff] %vm1632, %v1605
      %1644 = vst.msk [vmem:[%s334 + $0x58] sm:$0xff] %vm1632, %v1607
      %1645 = vst.msk [vmem:[%s334 + $0x60] sm:$0xff] %vm1632, %v1609
      %1646 = vst.msk [vmem:[%s334 + $0x68] sm:$0xff] %vm1632, %v1611
      %1647 = vst.msk [vmem:[%s334 + $0x70] sm:$0xff] %vm1632, %v1613
      %1648 = vst.msk [vmem:[%s334 + $0x78] sm:$0xff] %vm1632, %v1615
      %s1649 = smul.u32 16, %s20
      %p1650 = scmp.lt.s32.totalorder %s1649, 31
      %s1651 = scalar_select %p1650, %s1649, 31
      %s1652 = smul.addr %s1651, 8
      %s1653 = scalar_lea.vmem %s9, %s1652
      // Predicated region
      $region57: #{st_conv_block_forward.1} parent=55 // pred_check
        %p1654 = pneg %p232
      $region58: #{st_conv_block_forward.1} parent=55 // pred_check_branch
        %1656 = sbr.rel (%p1654) target = $region60
      $region59: #{st_conv_block_forward.1} parent=55 // pred_region
        %s1657 = smul.u32 16, %s20
      $region60: #{st_conv_block_forward.1} parent=55 // pred_fallthru
        _
    $region56: #{st_conv_block_forward.1} parent=5 // pred_fallthru
      _
    %p1658 = scmp.le.s32.totalorder 2, %s15
    // Predicated region
    $region61: #{st_conv_block_forward.1} parent=5 // pred_check
      %p1659 = pneg %p1658
    $region62: #{st_conv_block_forward.1} parent=5 // pred_check_branch
      %1661 = sbr.rel (%p1659) target = $region64
    $region63: #{st_conv_block_forward.1} parent=5 // pred_region
      %s1662 = ssub.s32 %s15, 2
      // Predicated region
      $region65: #{st_conv_block_forward.1} parent=63 // pred_check
        %p1663 = pneg %p238
      $region66: #{st_conv_block_forward.1} parent=63 // pred_check_branch
        %1665 = sbr.rel (%p1663) target = $region68
      $region67: #{st_conv_block_forward.1} parent=63 // pred_region
        %s1666 = smul.u32 16, %s21
        %p1667 = scmp.lt.s32.totalorder %s1666, 31
        %s1668 = scalar_select %p1667, %s1666, 31
        %s1669 = smul.addr %s1668, 8
        %s1670 = scalar_lea.vmem %s9, %s1669
      $region68: #{st_conv_block_forward.1} parent=63 // pred_fallthru
        _
    $region64: #{st_conv_block_forward.1} parent=5 // pred_fallthru
      _
  $region6: #{st_conv_block_forward.1} parent=0 // loop_footer
    %s19 = sadd.s32 1, %s15
  $region7: #{st_conv_block_forward.1} parent=0 // loop_footer_branch
    %14 = sbr.rel target = $region3
  $region8: #{st_conv_block_forward.1} parent=0 // loop_exit
    _

</llo_original>
